<compile_context>
chip_gen: v7x
topology: tpu7x:2x2x1
jax: 0.10.0
libtpu: 0.0.40
codegen_flags: <defaults>
</compile_context>

<pallas_src>
import functools

import jax
import jax.numpy as jnp
from jax.experimental import pallas as pl
from jax.experimental.pallas import tpu as pltpu


def _round_up(x, m):
    return ((x + m - 1) // m) * m


def _pick_c_tile(c, n_rows, itemsize=4, target_bytes=2 * 1024 * 1024):
    """Largest lane-dense (multiple-of-128) channel tile dividing `c` whose
    staged block stays under ~target_bytes.  Falls back to the full channel
    count when C is not a multiple of 128 (a full-extent last dim is always a
    legal block shape, just with masked stores)."""
    if c % 128 != 0:
        return c
    best = 128
    for cand in range(128, c + 1, 128):
        if c % cand == 0 and cand * n_rows * itemsize <= target_bytes:
            best = cand
    return best


def _dwconv_kernel(x_ref, w_ref, b_ref, o_ref, xpad_ref, *, W, N, pad):
    ct = o_ref.shape[-1]

    # Stage the (N, C_tile) tile into a zero-haloed VMEM scratch so every tap
    # is a static, in-bounds shifted read of data already resident in VMEM.
    xpad_ref[pl.ds(0, pad), :] = jnp.zeros((pad, ct), jnp.float32)
    xpad_ref[pl.ds(pad + N, pad), :] = jnp.zeros((pad, ct), jnp.float32)
    xpad_ref[pl.ds(pad, N), :] = x_ref[0].astype(jnp.float32)

    wk = w_ref[...].astype(jnp.float32)                   # (9, C_tile)

    # Output-column masks for the flattened layout: the dx=-1 taps are invalid
    # in column 0, the dx=+1 taps are invalid in column W-1.  One select per
    # side (applied to the summed column group), not per tap.
    col = jax.lax.broadcasted_iota(jnp.int32, (N, 1), 0) % W
    ok_left = col > 0
    ok_right = col < (W - 1)

    def col_sum(dx):
        """Sum of the three vertical taps at horizontal offset dx."""
        acc = None
        for dy in (-1, 0, 1):
            t = (dy + 1) * 3 + (dx + 1)
            start = pad + dy * W + dx
            contrib = xpad_ref[pl.ds(start, N), :] * wk[t:t + 1, :]
            acc = contrib if acc is None else acc + contrib
        return acc

    center = col_sum(0)
    left = jnp.where(ok_left, col_sum(-1), 0.0)
    right = jnp.where(ok_right, col_sum(1), 0.0)

    out = center + left + right + b_ref[...].astype(jnp.float32)
    o_ref[...] = out[None].astype(o_ref.dtype)


def dwconv_forward(weight, bias, x, H, W):
    """DWConv.forward: depthwise 3x3 / stride 1 / pad 1 / groups=C on tokens.

    x: (B, N, C) with N == H*W; weight: (C, 1, 3, 3) (PyTorch layout);
    bias: (C,).  Returns (B, N, C).
    """
    B, N, C = x.shape
    assert N == H * W, "token count must equal H*W"

    pad = _round_up(W + 1, 8)            # zero halo covering all vertical taps
    n_pad = N + 2 * pad
    c_tile = _pick_c_tile(C, n_pad)
    n_ct = C // c_tile

    w9 = jnp.transpose(weight.reshape(C, 9), (1, 0))      # (9, C); t = ky*3+kx
    b2 = bias.reshape(1, C)

    kernel = functools.partial(_dwconv_kernel, W=W, N=N, pad=pad)
    return pl.pallas_call(
        kernel,
        out_shape=jax.ShapeDtypeStruct((B, N, C), x.dtype),
        grid=(B, n_ct),
        in_specs=[
            pl.BlockSpec((1, N, c_tile), lambda b, c: (b, 0, c)),
            pl.BlockSpec((9, c_tile), lambda b, c: (0, c)),
            pl.BlockSpec((1, c_tile), lambda b, c: (0, c)),
        ],
        out_specs=pl.BlockSpec((1, N, c_tile), lambda b, c: (b, 0, c)),
        scratch_shapes=[pltpu.VMEM((n_pad, c_tile), jnp.float32)],
        compiler_params=pltpu.CompilerParams(
            dimension_semantics=("parallel", "parallel")),
    )(x, w9, b2)


def dwconv_reference(weight, bias, x, H, W):
    """Pure-JAX reference mirroring the PyTorch module exactly."""
    B, N, C = x.shape
    img = jnp.transpose(x, (0, 2, 1)).reshape(B, C, H, W)
    out = jax.lax.conv_general_dilated(
        img, weight, window_strides=(1, 1), padding=((1, 1), (1, 1)),
        dimension_numbers=("NCHW", "OIHW", "NCHW"),
        feature_group_count=C, precision=jax.lax.Precision.HIGHEST)
    out = out + bias.reshape(1, C, 1, 1)
    return jnp.transpose(out.reshape(B, C, N), (0, 2, 1))


def _run_case(key, B, H, W, C):
    kx, kw, kb = jax.random.split(key, 3)
    x = jax.random.normal(kx, (B, H * W, C), jnp.float32)
    weight = jax.random.normal(kw, (C, 1, 3, 3), jnp.float32) * 0.1
    bias = jax.random.normal(kb, (C,), jnp.float32) * 0.01

    fwd = jax.jit(functools.partial(dwconv_forward, H=H, W=W))
    out = fwd(weight, bias, x)
    jax.block_until_ready(out)

    assert out.shape == (B, H * W, C)
    assert bool(jnp.all(jnp.isfinite(out)))
    ref = dwconv_reference(weight, bias, x, H, W)
    err = float(jnp.max(jnp.abs(out - ref)))
    assert err < 1e-4, f"mismatch vs reference ({B},{H},{W},{C}): {err}"


if __name__ == "__main__":
    key = jax.random.PRNGKey(0)
    k0, k1 = jax.random.split(key)
    # Small shapes: lane axis fully dense (C multiple of 128) while tiny.
    _run_case(k0, B=2, H=16, W=16, C=128)
    # Second sanity shape (different H/W/C, still lane-dense).
    _run_case(k1, B=1, H=8, W=8, C=256)
    print("KERNEL_OK")
</pallas_src>

<mosaic_0001>
module attributes {stable_mosaic.version = 11 : i64} {
  func.func @_dwconv_kernel(%arg0: i32, %arg1: i32, %arg2: memref<1x256x128xf32, #tpu.memory_space<vmem>>, %arg3: memref<9x128xf32, #tpu.memory_space<vmem>>, %arg4: memref<1x128xf32, #tpu.memory_space<vmem>>, %arg5: memref<1x256x128xf32, #tpu.memory_space<vmem>>, %arg6: memref<304x128xf32, #tpu.memory_space<vmem>>) attributes {dimension_semantics = [#tpu.dimension_semantics<parallel>, #tpu.dimension_semantics<parallel>], iteration_bounds = array<i64: 2, 1>, scalar_prefetch = 0 : i64, scratch_operands = 1 : i64, tpu.core_type = #tpu.core_type<tc>, window_params = [{transform_indices = @transform_0, window_bounds = array<i64: 1, 256, 128>}, {transform_indices = @transform_1, window_bounds = array<i64: 9, 128>}, {transform_indices = @transform_2, window_bounds = array<i64: 1, 128>}, {transform_indices = @transform_3, window_bounds = array<i64: 1, 256, 128>}]} {
    %cst = arith.constant 0.000000e+00 : f32
    %0 = vector.broadcast %cst : f32 to vector<24x128xf32>
    %c0 = arith.constant 0 : index
    %c0_0 = arith.constant 0 : index
    %1 = vector.load %arg6[%c0, %c0_0] : memref<304x128xf32, #tpu.memory_space<vmem>>, vector<24x128xf32>
    tpu.vector_store %arg6[%c0, %c0_0], %0 {strides = array<i32>} : memref<304x128xf32, #tpu.memory_space<vmem>>, vector<24x128xf32>,
    %cst_1 = arith.constant 0.000000e+00 : f32
    %2 = vector.broadcast %cst_1 : f32 to vector<24x128xf32>
    %c280 = arith.constant 280 : index
    %c0_2 = arith.constant 0 : index
    %3 = vector.load %arg6[%c280, %c0_2] : memref<304x128xf32, #tpu.memory_space<vmem>>, vector<24x128xf32>
    tpu.vector_store %arg6[%c280, %c0_2], %2 {strides = array<i32>} : memref<304x128xf32, #tpu.memory_space<vmem>>, vector<24x128xf32>,
    %c0_3 = arith.constant 0 : index
    %c0_4 = arith.constant 0 : index
    %c0_5 = arith.constant 0 : index
    %4 = vector.load %arg2[%c0_3, %c0_4, %c0_5] : memref<1x256x128xf32, #tpu.memory_space<vmem>>, vector<1x256x128xf32>
    %5 = vector.shape_cast %4 : vector<1x256x128xf32> to vector<256x128xf32>
    %c24 = arith.constant 24 : index
    %c0_6 = arith.constant 0 : index
    %6 = vector.load %arg6[%c24, %c0_6] : memref<304x128xf32, #tpu.memory_space<vmem>>, vector<256x128xf32>
    tpu.vector_store %arg6[%c24, %c0_6], %5 {strides = array<i32>} : memref<304x128xf32, #tpu.memory_space<vmem>>, vector<256x128xf32>,
    %c0_7 = arith.constant 0 : index
    %c0_8 = arith.constant 0 : index
    %7 = vector.load %arg3[%c0_7, %c0_8] : memref<9x128xf32, #tpu.memory_space<vmem>>, vector<9x128xf32>
    %8 = tpu.iota {dimensions = array<i32: 0>} : vector<256x1xi32>
    %c16_i32 = arith.constant 16 : i32
    %c0_i32 = arith.constant 0 : i32
    %9 = arith.cmpi eq, %c16_i32, %c0_i32 : i32
    %c1_i32 = arith.constant 1 : i32
    %10 = arith.select %9, %c1_i32, %c16_i32 : i32
    %11 = vector.broadcast %10 : i32 to vector<256x1xi32>
    %12 = arith.remsi %8, %11 : vector<256x1xi32>
    %c0_i32_9 = arith.constant 0 : i32
    %13 = vector.broadcast %c0_i32_9 : i32 to vector<256x1xi32>
    %14 = arith.cmpi ne, %12, %13 : vector<256x1xi32>
    %c0_i32_10 = arith.constant 0 : i32
    %15 = vector.broadcast %c0_i32_10 : i32 to vector<256x1xi32>
    %16 = arith.cmpi slt, %12, %15 : vector<256x1xi32>
    %c0_i32_11 = arith.constant 0 : i32
    %17 = arith.cmpi slt, %10, %c0_i32_11 : i32
    %18 = vector.broadcast %17 : i1 to vector<256x1xi1>
    %19 = vector.broadcast %18 : vector<256x1xi1> to vector<256x1xi1>
    %20 = arith.xori %16, %19 : vector<256x1xi1>
    %21 = arith.andi %20, %14 : vector<256x1xi1>
    %22 = vector.broadcast %10 : i32 to vector<256x1xi32>
    %23 = arith.addi %12, %22 : vector<256x1xi32>
    %24 = arith.select %21, %23, %12 : vector<256x1xi1>, vector<256x1xi32>
    %c0_i32_12 = arith.constant 0 : i32
    %25 = vector.broadcast %c0_i32_12 : i32 to vector<256x1xi32>
    %26 = arith.cmpi sgt, %24, %25 : vector<256x1xi32>
    %c15_i32 = arith.constant 15 : i32
    %27 = vector.broadcast %c15_i32 : i32 to vector<256x1xi32>
    %28 = arith.cmpi slt, %24, %27 : vector<256x1xi32>
    %c8 = arith.constant 8 : index
    %c0_13 = arith.constant 0 : index
    %29 = vector.load %arg6[%c8, %c0_13] : memref<304x128xf32, #tpu.memory_space<vmem>>, vector<256x128xf32>
    %30 = vector.extract_strided_slice %7 {offsets = [1, 0], sizes = [1, 128], strides = [1, 1]} : vector<9x128xf32> to vector<1x128xf32>
    %31 = vector.broadcast %30 : vector<1x128xf32> to vector<256x128xf32>
    %32 = arith.mulf %29, %31 : vector<256x128xf32>
    %c24_14 = arith.constant 24 : index
    %c0_15 = arith.constant 0 : index
    %33 = vector.load %arg6[%c24_14, %c0_15] : memref<304x128xf32, #tpu.memory_space<vmem>>, vector<256x128xf32>
    %34 = vector.extract_strided_slice %7 {offsets = [4, 0], sizes = [1, 128], strides = [1, 1]} : vector<9x128xf32> to vector<1x128xf32>
    %35 = vector.broadcast %34 : vector<1x128xf32> to vector<256x128xf32>
    %36 = arith.mulf %33, %35 : vector<256x128xf32>
    %37 = arith.addf %32, %36 : vector<256x128xf32>
    %c40 = arith.constant 40 : index
    %c0_16 = arith.constant 0 : index
    %38 = vector.load %arg6[%c40, %c0_16] : memref<304x128xf32, #tpu.memory_space<vmem>>, vector<256x128xf32>
    %39 = vector.extract_strided_slice %7 {offsets = [7, 0], sizes = [1, 128], strides = [1, 1]} : vector<9x128xf32> to vector<1x128xf32>
    %40 = vector.broadcast %39 : vector<1x128xf32> to vector<256x128xf32>
    %41 = arith.mulf %38, %40 : vector<256x128xf32>
    %42 = arith.addf %37, %41 : vector<256x128xf32>
    %c7 = arith.constant 7 : index
    %c0_17 = arith.constant 0 : index
    %43 = vector.load %arg6[%c7, %c0_17] : memref<304x128xf32, #tpu.memory_space<vmem>>, vector<256x128xf32>
    %44 = vector.extract_strided_slice %7 {offsets = [0, 0], sizes = [1, 128], strides = [1, 1]} : vector<9x128xf32> to vector<1x128xf32>
    %45 = vector.broadcast %44 : vector<1x128xf32> to vector<256x128xf32>
    %46 = arith.mulf %43, %45 : vector<256x128xf32>
    %c23 = arith.constant 23 : index
    %c0_18 = arith.constant 0 : index
    %47 = vector.load %arg6[%c23, %c0_18] : memref<304x128xf32, #tpu.memory_space<vmem>>, vector<256x128xf32>
    %48 = vector.extract_strided_slice %7 {offsets = [3, 0], sizes = [1, 128], strides = [1, 1]} : vector<9x128xf32> to vector<1x128xf32>
    %49 = vector.broadcast %48 : vector<1x128xf32> to vector<256x128xf32>
    %50 = arith.mulf %47, %49 : vector<256x128xf32>
    %51 = arith.addf %46, %50 : vector<256x128xf32>
    %c39 = arith.constant 39 : index
    %c0_19 = arith.constant 0 : index
    %52 = vector.load %arg6[%c39, %c0_19] : memref<304x128xf32, #tpu.memory_space<vmem>>, vector<256x128xf32>
    %53 = vector.extract_strided_slice %7 {offsets = [6, 0], sizes = [1, 128], strides = [1, 1]} : vector<9x128xf32> to vector<1x128xf32>
    %54 = vector.broadcast %53 : vector<1x128xf32> to vector<256x128xf32>
    %55 = arith.mulf %52, %54 : vector<256x128xf32>
    %56 = arith.addf %51, %55 : vector<256x128xf32>
    %cst_20 = arith.constant 0.000000e+00 : f32
    %57 = vector.shape_cast %26 : vector<256x1xi1> to vector<256x1xi1>
    %58 = vector.broadcast %57 : vector<256x1xi1> to vector<256x128xi1>
    %59 = vector.broadcast %cst_20 : f32 to vector<256x128xf32>
    %60 = arith.select %58, %56, %59 : vector<256x128xi1>, vector<256x128xf32>
    %c9 = arith.constant 9 : index
    %c0_21 = arith.constant 0 : index
    %61 = vector.load %arg6[%c9, %c0_21] : memref<304x128xf32, #tpu.memory_space<vmem>>, vector<256x128xf32>
    %62 = vector.extract_strided_slice %7 {offsets = [2, 0], sizes = [1, 128], strides = [1, 1]} : vector<9x128xf32> to vector<1x128xf32>
    %63 = vector.broadcast %62 : vector<1x128xf32> to vector<256x128xf32>
    %64 = arith.mulf %61, %63 : vector<256x128xf32>
    %c25 = arith.constant 25 : index
    %c0_22 = arith.constant 0 : index
    %65 = vector.load %arg6[%c25, %c0_22] : memref<304x128xf32, #tpu.memory_space<vmem>>, vector<256x128xf32>
    %66 = vector.extract_strided_slice %7 {offsets = [5, 0], sizes = [1, 128], strides = [1, 1]} : vector<9x128xf32> to vector<1x128xf32>
    %67 = vector.broadcast %66 : vector<1x128xf32> to vector<256x128xf32>
    %68 = arith.mulf %65, %67 : vector<256x128xf32>
    %69 = arith.addf %64, %68 : vector<256x128xf32>
    %c41 = arith.constant 41 : index
    %c0_23 = arith.constant 0 : index
    %70 = vector.load %arg6[%c41, %c0_23] : memref<304x128xf32, #tpu.memory_space<vmem>>, vector<256x128xf32>
    %71 = vector.extract_strided_slice %7 {offsets = [8, 0], sizes = [1, 128], strides = [1, 1]} : vector<9x128xf32> to vector<1x128xf32>
    %72 = vector.broadcast %71 : vector<1x128xf32> to vector<256x128xf32>
    %73 = arith.mulf %70, %72 : vector<256x128xf32>
    %74 = arith.addf %69, %73 : vector<256x128xf32>
    %cst_24 = arith.constant 0.000000e+00 : f32
    %75 = vector.shape_cast %28 : vector<256x1xi1> to vector<256x1xi1>
    %76 = vector.broadcast %75 : vector<256x1xi1> to vector<256x128xi1>
    %77 = vector.broadcast %cst_24 : f32 to vector<256x128xf32>
    %78 = arith.select %76, %74, %77 : vector<256x128xi1>, vector<256x128xf32>
    %79 = arith.addf %42, %60 : vector<256x128xf32>
    %80 = arith.addf %79, %78 : vector<256x128xf32>
    %c0_25 = arith.constant 0 : index
    %c0_26 = arith.constant 0 : index
    %81 = vector.load %arg4[%c0_25, %c0_26] : memref<1x128xf32, #tpu.memory_space<vmem>>, vector<1x128xf32>
    %82 = vector.broadcast %81 : vector<1x128xf32> to vector<256x128xf32>
    %83 = arith.addf %80, %82 : vector<256x128xf32>
    %84 = vector.shape_cast %83 : vector<256x128xf32> to vector<1x256x128xf32>
    %c0_27 = arith.constant 0 : index
    %c0_28 = arith.constant 0 : index
    %c0_29 = arith.constant 0 : index
    %85 = vector.load %arg5[%c0_27, %c0_28, %c0_29] : memref<1x256x128xf32, #tpu.memory_space<vmem>>, vector<1x256x128xf32>
    tpu.vector_store %arg5[%c0_27, %c0_28, %c0_29], %84 {strides = array<i32>} : memref<1x256x128xf32, #tpu.memory_space<vmem>>, vector<1x256x128xf32>,
    return
  }
  func.func @transform_0(%arg0: i32, %arg1: i32) -> (i32, i32, i32) {
    %c0_i32 = arith.constant 0 : i32
    %c0_i32_0 = arith.constant 0 : i32
    return %arg0, %c0_i32, %arg1 : i32, i32, i32
  }
  func.func @transform_1(%arg0: i32, %arg1: i32) -> (i32, i32) {
    %c0_i32 = arith.constant 0 : i32
    %c0_i32_0 = arith.constant 0 : i32
    return %c0_i32, %arg1 : i32, i32
  }
  func.func @transform_2(%arg0: i32, %arg1: i32) -> (i32, i32) {
    %c0_i32 = arith.constant 0 : i32
    %c0_i32_0 = arith.constant 0 : i32
    return %c0_i32, %arg1 : i32, i32
  }
  func.func @transform_3(%arg0: i32, %arg1: i32) -> (i32, i32, i32) {
    %c0_i32 = arith.constant 0 : i32
    %c0_i32_0 = arith.constant 0 : i32
    return %arg0, %c0_i32, %arg1 : i32, i32, i32
  }
}

</mosaic_0001>

<llo_original>
// kernel: dwconv_forward.1
$region0: #{dwconv_forward.1}
  #allocation0 [shape = 'u32[]', space=smem, size = 0x4, offset = 0x4, fixed_abs, tag = 'smem constant byte address 0x4 - core index']
  #allocation1 [shape = 'u32[144,128]{1,0:T(1,128)}', space=vmem, size = 0x12000, scoped, tag = 'internal scratch']
  #allocation2 [shape = 'f32[304,128]{1,0:T(8,128)}', space=vmem, size = 0x26000, scoped, tag = 'scratch operand']
  %s0 = inlined_call_operand.hbm [shape: f32[2,256,128], index: 0, kind: input, shape index: {}]
  %s1 = inlined_call_operand.vmem [shape: f32[9,128], index: 1, kind: input, shape index: {}]
  %s2 = inlined_call_operand.vmem [shape: f32[1,128], index: 2, kind: input, shape index: {}]
  %s3 = inlined_call_operand.hbm [shape: f32[2,256,128], index: 3, kind: output, shape index: {}]
  %s4 = sld [smem:[#allocation0]]
  $region49: #{dwconv_forward.1} parent=0
    _
  %s6 = ssub.s32 1, %s4
  %s7 = scalar_select 0, %s6, %s4
  $region1: #{dwconv_forward.1} parent=0
    #allocation3 [shape = 'u8[262144]{0}', space=vmem, size = 0x40000, scoped, tag = 'input window, operand 0']
    #allocation4 [shape = 's32[2]{0}', space=sflag, size = 0x8, scoped, tag = 'scoped memory for dwconv_forward.1']
    #allocation5 [shape = 's32[2]{0}', space=sflag, size = 0x8, scoped, tag = 'scoped memory for dwconv_forward.1']
    #allocation6 [shape = 'u8[262144]{0}', space=vmem, size = 0x40000, scoped, tag = 'output window, operand 0']
    %8 = vsyncpa [#allocation4], 0
    %s9 = scalar_lea.sflag [#allocation4], 1
    %10 = vsyncpa %s9, 0
    %11 = vsyncpa [#allocation5], 0
    %s12 = scalar_lea.sflag [#allocation5], 1
    %13 = vsyncpa %s12, 0
    loop: start=0, step=1, limit=4
    $region2: #{dwconv_forward.1} parent=1 // loop_pre_header
      _
    $region3: #{dwconv_forward.1} parent=1 // loop_header
      %s15 = sphi 0, %s19
      %p16 = scmp.ge.s32.totalorder %s15, 4
      %s22 = sphi 0, %s34
      %s23 = sphi 0, %s30
      %s24 = sphi 0, %s22
      %s25 = sphi 0, %s23
      %s26 = sphi 0, %s24
      %s27 = sphi 0, %s25
      %s39 = sphi 0, %s41
      %s42 = sphi 0, %s39
      %s43 = sphi 0, %s42
      %s59 = sphi 0, %s43
      %s65 = sphi 0, %s67
      %s68 = sphi 0, %s65
      %s69 = sphi 0, %s68
      %s85 = sphi 0, %s69
      %s91 = sphi 0, %s93
      %s94 = sphi 0, %s91
      %s95 = sphi 0, %s94
      %s111 = sphi 0, %s95
      %s119 = sphi 0, %s121
      %s122 = sphi 0, %s119
      %s123 = sphi 0, %s122
      %s139 = sphi 0, %s123
    $region4: #{dwconv_forward.1} parent=1 // loop_header_branch
      %18 = sbr.rel (%p16) target = $region8
    $region5: #{dwconv_forward.1} parent=1 // loop_body
      %s20 = ssub.s32 %s15, 1
      %s21 = ssub.s32 %s15, 2
      %s28 = sadd.s32 1, %s23
      %p29 = scmp.ge.s32.totalorder %s28, 1
      %s30 = scalar_select %p29, 0, %s28
      %s31 = sadd.s32 1, %s22
      %s32 = scalar_select %p29, %s31, %s22
      %p33 = scmp.ge.s32.totalorder %s32, 2
      %s34 = scalar_select %p33, 0, %s32
      %s35 = ssub.s32 %s22, %s34
      %s36 = ssub.s32 %s23, %s30
      %s37 = sor.u32 %s35, %s36
      %p38 = scmp.eq.s32.totalorder %s37, 0
      %s40 = sadd.s32 %s39, 1
      %s41 = scalar_select %p38, %s39, %s40
      %p44 = pneg %p38
      %p45 = scmp.eq.s32.totalorder %s15, 1
      %p46 = por %p44, %p45
      %p47 = scmp.ne.s32.totalorder %s39, %s42
      %p48 = scmp.eq.s32.totalorder %s15, 0
      %p49 = por %p47, %p48
      %p50 = scmp.ne.s32.totalorder %s39, %s42
      %p51 = scmp.eq.s32.totalorder %s20, 1
      %p52 = por %p50, %p51
      %p53 = scmp.ne.s32.totalorder %s42, %s43
      %p54 = scmp.eq.s32.totalorder %s20, 0
      %p55 = por %p53, %p54
      %p56 = scmp.ne.s32.totalorder %s42, %s43
      %p57 = scmp.eq.s32.totalorder %s21, 1
      %p58 = por %p56, %p57
      %p60 = scmp.ne.s32.totalorder %s43, %s59
      %p61 = scmp.eq.s32.totalorder %s21, 0
      %p62 = por %p60, %p61
      %s63 = ssub.s32 %s23, %s30
      %p64 = scmp.eq.s32.totalorder %s63, 0
      %s66 = sadd.s32 %s65, 1
      %s67 = scalar_select %p64, %s65, %s66
      %p70 = pneg %p64
      %p71 = scmp.eq.s32.totalorder %s15, 1
      %p72 = por %p70, %p71
      %p73 = scmp.ne.s32.totalorder %s65, %s68
      %p74 = scmp.eq.s32.totalorder %s15, 0
      %p75 = por %p73, %p74
      %p76 = scmp.ne.s32.totalorder %s65, %s68
      %p77 = scmp.eq.s32.totalorder %s20, 1
      %p78 = por %p76, %p77
      %p79 = scmp.ne.s32.totalorder %s68, %s69
      %p80 = scmp.eq.s32.totalorder %s20, 0
      %p81 = por %p79, %p80
      %p82 = scmp.ne.s32.totalorder %s68, %s69
      %p83 = scmp.eq.s32.totalorder %s21, 1
      %p84 = por %p82, %p83
      %p86 = scmp.ne.s32.totalorder %s69, %s85
      %p87 = scmp.eq.s32.totalorder %s21, 0
      %p88 = por %p86, %p87
      %s89 = ssub.s32 %s23, %s30
      %p90 = scmp.eq.s32.totalorder %s89, 0
      %s92 = sadd.s32 %s91, 1
      %s93 = scalar_select %p90, %s91, %s92
      %p96 = pneg %p90
      %p97 = scmp.eq.s32.totalorder %s15, 1
      %p98 = por %p96, %p97
      %p99 = scmp.ne.s32.totalorder %s91, %s94
      %p100 = scmp.eq.s32.totalorder %s15, 0
      %p101 = por %p99, %p100
      %p102 = scmp.ne.s32.totalorder %s91, %s94
      %p103 = scmp.eq.s32.totalorder %s20, 1
      %p104 = por %p102, %p103
      %p105 = scmp.ne.s32.totalorder %s94, %s95
      %p106 = scmp.eq.s32.totalorder %s20, 0
      %p107 = por %p105, %p106
      %p108 = scmp.ne.s32.totalorder %s94, %s95
      %p109 = scmp.eq.s32.totalorder %s21, 1
      %p110 = por %p108, %p109
      %p112 = scmp.ne.s32.totalorder %s95, %s111
      %p113 = scmp.eq.s32.totalorder %s21, 0
      %p114 = por %p112, %p113
      %s115 = ssub.s32 %s22, %s34
      %s116 = ssub.s32 %s23, %s30
      %s117 = sor.u32 %s115, %s116
      %p118 = scmp.eq.s32.totalorder %s117, 0
      %s120 = sadd.s32 %s119, 1
      %s121 = scalar_select %p118, %s119, %s120
      %p124 = pneg %p118
      %p125 = scmp.eq.s32.totalorder %s15, 1
      %p126 = por %p124, %p125
      %p127 = scmp.ne.s32.totalorder %s119, %s122
      %p128 = scmp.eq.s32.totalorder %s15, 0
      %p129 = por %p127, %p128
      %p130 = scmp.ne.s32.totalorder %s119, %s122
      %p131 = scmp.eq.s32.totalorder %s20, 1
      %p132 = por %p130, %p131
      %p133 = scmp.ne.s32.totalorder %s122, %s123
      %p134 = scmp.eq.s32.totalorder %s20, 0
      %p135 = por %p133, %p134
      %p136 = scmp.ne.s32.totalorder %s122, %s123
      %p137 = scmp.eq.s32.totalorder %s21, 1
      %p138 = por %p136, %p137
      %p140 = scmp.ne.s32.totalorder %s123, %s139
      %p141 = scmp.eq.s32.totalorder %s21, 0
      %p142 = por %p140, %p141
      %p143 = scmp.le.s32.totalorder 1, %s15
      %p144 = scmp.lt.s32.totalorder %s15, 3
      %p145 = pnand %p143, %p144
      %p146 = pneg %p145
      // Predicated region
      $region9: #{dwconv_forward.1} parent=5 // pred_check
        _
      $region10: #{dwconv_forward.1} parent=5 // pred_check_branch
        %148 = sbr.rel (%p145) target = $region12
      $region11: #{dwconv_forward.1} parent=5 // pred_region
        %s149 = ssub.s32 %s15, 1
        // Predicated region
        $region13: #{dwconv_forward.1} parent=11 // pred_check
          %p150 = pneg %p81
        $region14: #{dwconv_forward.1} parent=11 // pred_check_branch
          %152 = sbr.rel (%p150) target = $region16
        $region15: #{dwconv_forward.1} parent=11 // pred_region
          %p153 = scmp.lt.s32.totalorder %s25, 0
          %s154 = scalar_select %p153, %s25, 0
          %s155 = smul.addr %s154, 8
          %s156 = scalar_lea.vmem %s1, %s155
        $region16: #{dwconv_forward.1} parent=11 // pred_fallthru
          _
        // Predicated region
        $region17: #{dwconv_forward.1} parent=11 // pred_check
          %p157 = pneg %p107
        $region18: #{dwconv_forward.1} parent=11 // pred_check_branch
          %159 = sbr.rel (%p157) target = $region20
        $region19: #{dwconv_forward.1} parent=11 // pred_region
          %p160 = scmp.lt.s32.totalorder %s25, 0
          %s161 = scalar_select %p160, %s25, 0
          %s162 = scalar_lea.vmem %s2, %s161
        $region20: #{dwconv_forward.1} parent=11 // pred_fallthru
          _
      $region12: #{dwconv_forward.1} parent=5 // pred_fallthru
        _
      %p163 = scmp.lt.s32.totalorder %s15, 2
      // Predicated region
      $region21: #{dwconv_forward.1} parent=5 // pred_check
        %p164 = pneg %p163
      $region22: #{dwconv_forward.1} parent=5 // pred_check_branch
        %166 = sbr.rel (%p164) target = $region24
      $region23: #{dwconv_forward.1} parent=5 // pred_region
        // Predicated region
        $region25: #{dwconv_forward.1} parent=23 // pred_check
          %p167 = pneg %p49
        $region26: #{dwconv_forward.1} parent=23 // pred_check_branch
          %169 = sbr.rel (%p167) target = $region28
        $region27: #{dwconv_forward.1} parent=23 // pred_region
          %s170 = sand.u32 %s39, 1
          %s171 = scalar_lea.sflag [#allocation4], %s170
          %s172 = sand.u32 %s39, 1
          %s173 = smul.addr %s172, 256
          %s174 = scalar_lea.vmem [#allocation3], %s173
          %s176 = ssub.s32 4096, 4096
          %177 = vsyncadd %s171, %s176
          %s178 = smul.addr %s22, 32
          %s179 = sadd.s32 %s23, %s178
          %s180 = smul.addr %s179, 128
          %s181 = scalar_lea.hbm %s0, %s180
          %s182 = sshll.u32 %s174, 4
          %s183 = int_to_ptr.vmem [resolvable:$true] %s182
          %188 = dma.hbm_to_vmem [thread:$0]  %s181, 4096, %s183, %s171, 128, 128, 8
        $region28: #{dwconv_forward.1} parent=23 // pred_fallthru
          _
      $region24: #{dwconv_forward.1} parent=5 // pred_fallthru
        _
      %p189 = scmp.le.s32.totalorder 1, %s15
      %p190 = scmp.lt.s32.totalorder %s15, 3
      %p191 = pnand %p189, %p190
      %p192 = pneg %p191
      // Predicated region
      $region29: #{dwconv_forward.1} parent=5 // pred_check
        _
      $region30: #{dwconv_forward.1} parent=5 // pred_check_branch
        %194 = sbr.rel (%p191) target = $region32
      $region31: #{dwconv_forward.1} parent=5 // pred_region
        %s195 = ssub.s32 %s15, 1
        %s196 = sand.u32 %s42, 1
        %s197 = scalar_lea.sflag [#allocation4], %s196
        %s198 = sand.u32 %s42, 1
        %s199 = smul.addr %s198, 256
        %s200 = scalar_lea.vmem [#allocation3], %s199
        // Predicated region
        $region33: #{dwconv_forward.1} parent=31 // pred_check
          %p201 = pneg %p55
        $region34: #{dwconv_forward.1} parent=31 // pred_check_branch
          %203 = sbr.rel (%p201) target = $region36
        $region35: #{dwconv_forward.1} parent=31 // pred_region
          %204 = dma.done %s197, 4096
        $region36: #{dwconv_forward.1} parent=31 // pred_fallthru
          _
        %s205 = sand.u32 %s42, 1
        %s206 = scalar_lea.sflag [#allocation4], %s205
        %s207 = sand.u32 %s42, 1
        %s208 = smul.addr %s207, 256
        %s209 = scalar_lea.vmem [#allocation3], %s208
        %p210 = pneg %p55
        %p211 = pneg %p52
        %p212 = scmp.lt.s32.totalorder %s25, 0
        %s213 = scalar_select %p212, %s25, 0
        %s214 = smul.addr %s213, 8
        %s215 = scalar_lea.vmem %s1, %s214
        %p216 = pneg %p81
        %p217 = pneg %p78
        %p218 = scmp.lt.s32.totalorder %s25, 0
        %s219 = scalar_select %p218, %s25, 0
        %s220 = scalar_lea.vmem %s2, %s219
        %p221 = pneg %p107
        %p222 = pneg %p104
        %p223 = pneg %p135
        %p224 = pneg %p132
        %s225 = sand.u32 %s122, 1
        %s226 = scalar_lea.sflag [#allocation5], %s225
        %s227 = sand.u32 %s122, 1
        %s228 = smul.addr %s227, 256
        %s229 = scalar_lea.vmem [#allocation6], %s228
        %p230 = scmp.lt.s32.totalorder %s25, 0
        %s231 = scalar_select %p230, %s25, 0
        %s232 = smul.addr %s231, 8
        %s233 = scalar_lea.vmem %s1, %s232
        %p234 = scmp.lt.s32.totalorder %s25, 0
        %s235 = scalar_select %p234, %s25, 0
        %s236 = scalar_lea.vmem %s2, %s235
        %237 = vst [vmem:[#allocation2] sm:$0xff] 0.0
        %238 = vst [vmem:[#allocation2 + $0x8] sm:$0xff] 0.0
        %239 = vst [vmem:[#allocation2 + $0x10] sm:$0xff] 0.0
        %240 = vst [vmem:[#allocation2 + $0x118] sm:$0xff] 0.0
        %241 = vst [vmem:[#allocation2 + $0x120] sm:$0xff] 0.0
        %242 = vst [vmem:[#allocation2 + $0x128] sm:$0xff] 0.0
        %v243 = vld [vmem:[%s200] sm:$0xff]
        %v244 = vld [vmem:[%s200 + $0x8] sm:$0xff]
        %v245 = vld [vmem:[%s200 + $0x10] sm:$0xff]
        %v246 = vld [vmem:[%s200 + $0x18] sm:$0xff]
        %v247 = vld [vmem:[%s200 + $0x20] sm:$0xff]
        %v248 = vld [vmem:[%s200 + $0x28] sm:$0xff]
        %v249 = vld [vmem:[%s200 + $0x30] sm:$0xff]
        %v250 = vld [vmem:[%s200 + $0x38] sm:$0xff]
        %v251 = vld [vmem:[%s200 + $0x40] sm:$0xff]
        %v252 = vld [vmem:[%s200 + $0x48] sm:$0xff]
        %v253 = vld [vmem:[%s200 + $0x50] sm:$0xff]
        %v254 = vld [vmem:[%s200 + $0x58] sm:$0xff]
        %v255 = vld [vmem:[%s200 + $0x60] sm:$0xff]
        %v256 = vld [vmem:[%s200 + $0x68] sm:$0xff]
        %v257 = vld [vmem:[%s200 + $0x70] sm:$0xff]
        %v258 = vld [vmem:[%s200 + $0x78] sm:$0xff]
        %v259 = vld [vmem:[%s200 + $0x80] sm:$0xff]
        %v260 = vld [vmem:[%s200 + $0x88] sm:$0xff]
        %v261 = vld [vmem:[%s200 + $0x90] sm:$0xff]
        %v262 = vld [vmem:[%s200 + $0x98] sm:$0xff]
        %v263 = vld [vmem:[%s200 + $0xa0] sm:$0xff]
        %v264 = vld [vmem:[%s200 + $0xa8] sm:$0xff]
        %v265 = vld [vmem:[%s200 + $0xb0] sm:$0xff]
        %v266 = vld [vmem:[%s200 + $0xb8] sm:$0xff]
        %v267 = vld [vmem:[%s200 + $0xc0] sm:$0xff]
        %v268 = vld [vmem:[%s200 + $0xc8] sm:$0xff]
        %v269 = vld [vmem:[%s200 + $0xd0] sm:$0xff]
        %v270 = vld [vmem:[%s200 + $0xd8] sm:$0xff]
        %v271 = vld [vmem:[%s200 + $0xe0] sm:$0xff]
        %v272 = vld [vmem:[%s200 + $0xe8] sm:$0xff]
        %v273 = vld [vmem:[%s200 + $0xf0] sm:$0xff]
        %v274 = vld [vmem:[%s200 + $0xf8] sm:$0xff]
        %275 = vst [vmem:[#allocation2 + $0x18] sm:$0xff] %v243
        %276 = vst [vmem:[#allocation2 + $0x20] sm:$0xff] %v244
        %277 = vst [vmem:[#allocation2 + $0x28] sm:$0xff] %v245
        %278 = vst [vmem:[#allocation2 + $0x30] sm:$0xff] %v246
        %279 = vst [vmem:[#allocation2 + $0x38] sm:$0xff] %v247
        %280 = vst [vmem:[#allocation2 + $0x40] sm:$0xff] %v248
        %281 = vst [vmem:[#allocation2 + $0x48] sm:$0xff] %v249
        %282 = vst [vmem:[#allocation2 + $0x50] sm:$0xff] %v250
        %283 = vst [vmem:[#allocation2 + $0x58] sm:$0xff] %v251
        %284 = vst [vmem:[#allocation2 + $0x60] sm:$0xff] %v252
        %285 = vst [vmem:[#allocation2 + $0x68] sm:$0xff] %v253
        %286 = vst [vmem:[#allocation2 + $0x70] sm:$0xff] %v254
        %287 = vst [vmem:[#allocation2 + $0x78] sm:$0xff] %v255
        %288 = vst [vmem:[#allocation2 + $0x80] sm:$0xff] %v256
        %289 = vst [vmem:[#allocation2 + $0x88] sm:$0xff] %v257
        %290 = vst [vmem:[#allocation2 + $0x90] sm:$0xff] %v258
        %291 = vst [vmem:[#allocation2 + $0x98] sm:$0xff] %v259
        %292 = vst [vmem:[#allocation2 + $0xa0] sm:$0xff] %v260
        %293 = vst [vmem:[#allocation2 + $0xa8] sm:$0xff] %v261
        %294 = vst [vmem:[#allocation2 + $0xb0] sm:$0xff] %v262
        %295 = vst [vmem:[#allocation2 + $0xb8] sm:$0xff] %v263
        %296 = vst [vmem:[#allocation2 + $0xc0] sm:$0xff] %v264
        %297 = vst [vmem:[#allocation2 + $0xc8] sm:$0xff] %v265
        %298 = vst [vmem:[#allocation2 + $0xd0] sm:$0xff] %v266
        %299 = vst [vmem:[#allocation2 + $0xd8] sm:$0xff] %v267
        %300 = vst [vmem:[#allocation2 + $0xe0] sm:$0xff] %v268
        %301 = vst [vmem:[#allocation2 + $0xe8] sm:$0xff] %v269
        %302 = vst [vmem:[#allocation2 + $0xf0] sm:$0xff] %v270
        %303 = vst [vmem:[#allocation2 + $0xf8] sm:$0xff] %v271
        %304 = vst [vmem:[#allocation2 + $0x100] sm:$0xff] %v272
        %305 = vst [vmem:[#allocation2 + $0x108] sm:$0xff] %v273
        %306 = vst [vmem:[#allocation2 + $0x110] sm:$0xff] %v274
        %v307 = vld [vmem:[%s233] sm:$0xff]
        %v308 = vld [vmem:[%s233 + $0x8] sm:$0x1]
        %v309 = vlaneseq
        %v310 = vshrl.u32 %v309, 7
        %v311 = vadd.s32 %v310, 8
        %v312 = vadd.s32 %v310, 16
        %v313 = vadd.s32 %v310, 24
        %v314 = vadd.s32 %v310, 32
        %v315 = vadd.s32 %v310, 40
        %v316 = vadd.s32 %v310, 48
        %v317 = vadd.s32 %v310, 56
        %v318 = vadd.s32 %v310, 64
        %v319 = vadd.s32 %v310, 72
        %v320 = vadd.s32 %v310, 80
        %v321 = vadd.s32 %v310, 88
        %v322 = vadd.s32 %v310, 96
        %v323 = vadd.s32 %v310, 104
        %v324 = vadd.s32 %v310, 112
        %v325 = vadd.s32 %v310, 120
        %v326 = vadd.s32 %v310, 128
        %v327 = vadd.s32 %v310, 136
        %v328 = vadd.s32 %v310, 144
        %v329 = vadd.s32 %v310, 152
        %v330 = vadd.s32 %v310, 160
        %v331 = vadd.s32 %v310, 168
        %v332 = vadd.s32 %v310, 176
        %v333 = vadd.s32 %v310, 184
        %v334 = vadd.s32 %v310, 192
        %v335 = vadd.s32 %v310, 200
        %v336 = vadd.s32 %v310, 208
        %v337 = vadd.s32 %v310, 216
        %v338 = vadd.s32 %v310, 224
        %v339 = vadd.s32 %v310, 232
        %v340 = vadd.s32 %v310, 240
        %v341 = vadd.s32 %v310, 248
        %vm342 = vcmp.lt.s32.totalorder %v310, 0
        %v343 = vsub.s32 0, %v310
        %v344 = vsel %vm342, %v343, %v310
        %v345 = vshrl.u32 %v344, 4
        %v346 = vand.u32 %v344, 15
        %v347 = vsub.s32 0, %v346
        %v348 = vsel %vm342, %v347, %v346
        %vm349 = vcmp.lt.s32.totalorder %v311, 0
        %v350 = vsub.s32 0, %v311
        %v351 = vsel %vm349, %v350, %v311
        %v352 = vshrl.u32 %v351, 4
        %v353 = vand.u32 %v351, 15
        %v354 = vsub.s32 0, %v353
        %v355 = vsel %vm349, %v354, %v353
        %vm356 = vcmp.lt.s32.totalorder %v312, 0
        %v357 = vsub.s32 0, %v312
        %v358 = vsel %vm356, %v357, %v312
        %v359 = vshrl.u32 %v358, 4
        %v360 = vand.u32 %v358, 15
        %v361 = vsub.s32 0, %v360
        %v362 = vsel %vm356, %v361, %v360
        %vm363 = vcmp.lt.s32.totalorder %v313, 0
        %v364 = vsub.s32 0, %v313
        %v365 = vsel %vm363, %v364, %v313
        %v366 = vshrl.u32 %v365, 4
        %v367 = vand.u32 %v365, 15
        %v368 = vsub.s32 0, %v367
        %v369 = vsel %vm363, %v368, %v367
        %vm370 = vcmp.lt.s32.totalorder %v314, 0
        %v371 = vsub.s32 0, %v314
        %v372 = vsel %vm370, %v371, %v314
        %v373 = vshrl.u32 %v372, 4
        %v374 = vand.u32 %v372, 15
        %v375 = vsub.s32 0, %v374
        %v376 = vsel %vm370, %v375, %v374
        %vm377 = vcmp.lt.s32.totalorder %v315, 0
        %v378 = vsub.s32 0, %v315
        %v379 = vsel %vm377, %v378, %v315
        %v380 = vshrl.u32 %v379, 4
        %v381 = vand.u32 %v379, 15
        %v382 = vsub.s32 0, %v381
        %v383 = vsel %vm377, %v382, %v381
        %vm384 = vcmp.lt.s32.totalorder %v316, 0
        %v385 = vsub.s32 0, %v316
        %v386 = vsel %vm384, %v385, %v316
        %v387 = vshrl.u32 %v386, 4
        %v388 = vand.u32 %v386, 15
        %v389 = vsub.s32 0, %v388
        %v390 = vsel %vm384, %v389, %v388
        %vm391 = vcmp.lt.s32.totalorder %v317, 0
        %v392 = vsub.s32 0, %v317
        %v393 = vsel %vm391, %v392, %v317
        %v394 = vshrl.u32 %v393, 4
        %v395 = vand.u32 %v393, 15
        %v396 = vsub.s32 0, %v395
        %v397 = vsel %vm391, %v396, %v395
        %vm398 = vcmp.lt.s32.totalorder %v318, 0
        %v399 = vsub.s32 0, %v318
        %v400 = vsel %vm398, %v399, %v318
        %v401 = vshrl.u32 %v400, 4
        %v402 = vand.u32 %v400, 15
        %v403 = vsub.s32 0, %v402
        %v404 = vsel %vm398, %v403, %v402
        %vm405 = vcmp.lt.s32.totalorder %v319, 0
        %v406 = vsub.s32 0, %v319
        %v407 = vsel %vm405, %v406, %v319
        %v408 = vshrl.u32 %v407, 4
        %v409 = vand.u32 %v407, 15
        %v410 = vsub.s32 0, %v409
        %v411 = vsel %vm405, %v410, %v409
        %vm412 = vcmp.lt.s32.totalorder %v320, 0
        %v413 = vsub.s32 0, %v320
        %v414 = vsel %vm412, %v413, %v320
        %v415 = vshrl.u32 %v414, 4
        %v416 = vand.u32 %v414, 15
        %v417 = vsub.s32 0, %v416
        %v418 = vsel %vm412, %v417, %v416
        %vm419 = vcmp.lt.s32.totalorder %v321, 0
        %v420 = vsub.s32 0, %v321
        %v421 = vsel %vm419, %v420, %v321
        %v422 = vshrl.u32 %v421, 4
        %v423 = vand.u32 %v421, 15
        %v424 = vsub.s32 0, %v423
        %v425 = vsel %vm419, %v424, %v423
        %vm426 = vcmp.lt.s32.totalorder %v322, 0
        %v427 = vsub.s32 0, %v322
        %v428 = vsel %vm426, %v427, %v322
        %v429 = vshrl.u32 %v428, 4
        %v430 = vand.u32 %v428, 15
        %v431 = vsub.s32 0, %v430
        %v432 = vsel %vm426, %v431, %v430
        %vm433 = vcmp.lt.s32.totalorder %v323, 0
        %v434 = vsub.s32 0, %v323
        %v435 = vsel %vm433, %v434, %v323
        %v436 = vshrl.u32 %v435, 4
        %v437 = vand.u32 %v435, 15
        %v438 = vsub.s32 0, %v437
        %v439 = vsel %vm433, %v438, %v437
        %vm440 = vcmp.lt.s32.totalorder %v324, 0
        %v441 = vsub.s32 0, %v324
        %v442 = vsel %vm440, %v441, %v324
        %v443 = vshrl.u32 %v442, 4
        %v444 = vand.u32 %v442, 15
        %v445 = vsub.s32 0, %v444
        %v446 = vsel %vm440, %v445, %v444
        %vm447 = vcmp.lt.s32.totalorder %v325, 0
        %v448 = vsub.s32 0, %v325
        %v449 = vsel %vm447, %v448, %v325
        %v450 = vshrl.u32 %v449, 4
        %v451 = vand.u32 %v449, 15
        %v452 = vsub.s32 0, %v451
        %v453 = vsel %vm447, %v452, %v451
        %vm454 = vcmp.lt.s32.totalorder %v326, 0
        %v455 = vsub.s32 0, %v326
        %v456 = vsel %vm454, %v455, %v326
        %v457 = vshrl.u32 %v456, 4
        %v458 = vand.u32 %v456, 15
        %v459 = vsub.s32 0, %v458
        %v460 = vsel %vm454, %v459, %v458
        %vm461 = vcmp.lt.s32.totalorder %v327, 0
        %v462 = vsub.s32 0, %v327
        %v463 = vsel %vm461, %v462, %v327
        %v464 = vshrl.u32 %v463, 4
        %v465 = vand.u32 %v463, 15
        %v466 = vsub.s32 0, %v465
        %v467 = vsel %vm461, %v466, %v465
        %vm468 = vcmp.lt.s32.totalorder %v328, 0
        %v469 = vsub.s32 0, %v328
        %v470 = vsel %vm468, %v469, %v328
        %v471 = vshrl.u32 %v470, 4
        %v472 = vand.u32 %v470, 15
        %v473 = vsub.s32 0, %v472
        %v474 = vsel %vm468, %v473, %v472
        %vm475 = vcmp.lt.s32.totalorder %v329, 0
        %v476 = vsub.s32 0, %v329
        %v477 = vsel %vm475, %v476, %v329
        %v478 = vshrl.u32 %v477, 4
        %v479 = vand.u32 %v477, 15
        %v480 = vsub.s32 0, %v479
        %v481 = vsel %vm475, %v480, %v479
        %vm482 = vcmp.lt.s32.totalorder %v330, 0
        %v483 = vsub.s32 0, %v330
        %v484 = vsel %vm482, %v483, %v330
        %v485 = vshrl.u32 %v484, 4
        %v486 = vand.u32 %v484, 15
        %v487 = vsub.s32 0, %v486
        %v488 = vsel %vm482, %v487, %v486
        %vm489 = vcmp.lt.s32.totalorder %v331, 0
        %v490 = vsub.s32 0, %v331
        %v491 = vsel %vm489, %v490, %v331
        %v492 = vshrl.u32 %v491, 4
        %v493 = vand.u32 %v491, 15
        %v494 = vsub.s32 0, %v493
        %v495 = vsel %vm489, %v494, %v493
        %vm496 = vcmp.lt.s32.totalorder %v332, 0
        %v497 = vsub.s32 0, %v332
        %v498 = vsel %vm496, %v497, %v332
        %v499 = vshrl.u32 %v498, 4
        %v500 = vand.u32 %v498, 15
        %v501 = vsub.s32 0, %v500
        %v502 = vsel %vm496, %v501, %v500
        %vm503 = vcmp.lt.s32.totalorder %v333, 0
        %v504 = vsub.s32 0, %v333
        %v505 = vsel %vm503, %v504, %v333
        %v506 = vshrl.u32 %v505, 4
        %v507 = vand.u32 %v505, 15
        %v508 = vsub.s32 0, %v507
        %v509 = vsel %vm503, %v508, %v507
        %vm510 = vcmp.lt.s32.totalorder %v334, 0
        %v511 = vsub.s32 0, %v334
        %v512 = vsel %vm510, %v511, %v334
        %v513 = vshrl.u32 %v512, 4
        %v514 = vand.u32 %v512, 15
        %v515 = vsub.s32 0, %v514
        %v516 = vsel %vm510, %v515, %v514
        %vm517 = vcmp.lt.s32.totalorder %v335, 0
        %v518 = vsub.s32 0, %v335
        %v519 = vsel %vm517, %v518, %v335
        %v520 = vshrl.u32 %v519, 4
        %v521 = vand.u32 %v519, 15
        %v522 = vsub.s32 0, %v521
        %v523 = vsel %vm517, %v522, %v521
        %vm524 = vcmp.lt.s32.totalorder %v336, 0
        %v525 = vsub.s32 0, %v336
        %v526 = vsel %vm524, %v525, %v336
        %v527 = vshrl.u32 %v526, 4
        %v528 = vand.u32 %v526, 15
        %v529 = vsub.s32 0, %v528
        %v530 = vsel %vm524, %v529, %v528
        %vm531 = vcmp.lt.s32.totalorder %v337, 0
        %v532 = vsub.s32 0, %v337
        %v533 = vsel %vm531, %v532, %v337
        %v534 = vshrl.u32 %v533, 4
        %v535 = vand.u32 %v533, 15
        %v536 = vsub.s32 0, %v535
        %v537 = vsel %vm531, %v536, %v535
        %vm538 = vcmp.lt.s32.totalorder %v338, 0
        %v539 = vsub.s32 0, %v338
        %v540 = vsel %vm538, %v539, %v338
        %v541 = vshrl.u32 %v540, 4
        %v542 = vand.u32 %v540, 15
        %v543 = vsub.s32 0, %v542
        %v544 = vsel %vm538, %v543, %v542
        %vm545 = vcmp.lt.s32.totalorder %v339, 0
        %v546 = vsub.s32 0, %v339
        %v547 = vsel %vm545, %v546, %v339
        %v548 = vshrl.u32 %v547, 4
        %v549 = vand.u32 %v547, 15
        %v550 = vsub.s32 0, %v549
        %v551 = vsel %vm545, %v550, %v549
        %vm552 = vcmp.lt.s32.totalorder %v340, 0
        %v553 = vsub.s32 0, %v340
        %v554 = vsel %vm552, %v553, %v340
        %v555 = vshrl.u32 %v554, 4
        %v556 = vand.u32 %v554, 15
        %v557 = vsub.s32 0, %v556
        %v558 = vsel %vm552, %v557, %v556
        %vm559 = vcmp.lt.s32.totalorder %v341, 0
        %v560 = vsub.s32 0, %v341
        %v561 = vsel %vm559, %v560, %v341
        %v562 = vshrl.u32 %v561, 4
        %v563 = vand.u32 %v561, 15
        %v564 = vsub.s32 0, %v563
        %v565 = vsel %vm559, %v564, %v563
        %vm566 = vcmp.ne.s32.totalorder %v348, 0
        %vm567 = vcmp.ne.s32.totalorder %v355, 0
        %vm568 = vcmp.ne.s32.totalorder %v362, 0
        %vm569 = vcmp.ne.s32.totalorder %v369, 0
        %vm570 = vcmp.ne.s32.totalorder %v376, 0
        %vm571 = vcmp.ne.s32.totalorder %v383, 0
        %vm572 = vcmp.ne.s32.totalorder %v390, 0
        %vm573 = vcmp.ne.s32.totalorder %v397, 0
        %vm574 = vcmp.ne.s32.totalorder %v404, 0
        %vm575 = vcmp.ne.s32.totalorder %v411, 0
        %vm576 = vcmp.ne.s32.totalorder %v418, 0
        %vm577 = vcmp.ne.s32.totalorder %v425, 0
        %vm578 = vcmp.ne.s32.totalorder %v432, 0
        %vm579 = vcmp.ne.s32.totalorder %v439, 0
        %vm580 = vcmp.ne.s32.totalorder %v446, 0
        %vm581 = vcmp.ne.s32.totalorder %v453, 0
        %vm582 = vcmp.ne.s32.totalorder %v460, 0
        %vm583 = vcmp.ne.s32.totalorder %v467, 0
        %vm584 = vcmp.ne.s32.totalorder %v474, 0
        %vm585 = vcmp.ne.s32.totalorder %v481, 0
        %vm586 = vcmp.ne.s32.totalorder %v488, 0
        %vm587 = vcmp.ne.s32.totalorder %v495, 0
        %vm588 = vcmp.ne.s32.totalorder %v502, 0
        %vm589 = vcmp.ne.s32.totalorder %v509, 0
        %vm590 = vcmp.ne.s32.totalorder %v516, 0
        %vm591 = vcmp.ne.s32.totalorder %v523, 0
        %vm592 = vcmp.ne.s32.totalorder %v530, 0
        %vm593 = vcmp.ne.s32.totalorder %v537, 0
        %vm594 = vcmp.ne.s32.totalorder %v544, 0
        %vm595 = vcmp.ne.s32.totalorder %v551, 0
        %vm596 = vcmp.ne.s32.totalorder %v558, 0
        %vm597 = vcmp.ne.s32.totalorder %v565, 0
        %vm598 = vcmp.lt.s32.totalorder %v348, 0
        %vm599 = vcmp.lt.s32.totalorder %v355, 0
        %vm600 = vcmp.lt.s32.totalorder %v362, 0
        %vm601 = vcmp.lt.s32.totalorder %v369, 0
        %vm602 = vcmp.lt.s32.totalorder %v376, 0
        %vm603 = vcmp.lt.s32.totalorder %v383, 0
        %vm604 = vcmp.lt.s32.totalorder %v390, 0
        %vm605 = vcmp.lt.s32.totalorder %v397, 0
        %vm606 = vcmp.lt.s32.totalorder %v404, 0
        %vm607 = vcmp.lt.s32.totalorder %v411, 0
        %vm608 = vcmp.lt.s32.totalorder %v418, 0
        %vm609 = vcmp.lt.s32.totalorder %v425, 0
        %vm610 = vcmp.lt.s32.totalorder %v432, 0
        %vm611 = vcmp.lt.s32.totalorder %v439, 0
        %vm612 = vcmp.lt.s32.totalorder %v446, 0
        %vm613 = vcmp.lt.s32.totalorder %v453, 0
        %vm614 = vcmp.lt.s32.totalorder %v460, 0
        %vm615 = vcmp.lt.s32.totalorder %v467, 0
        %vm616 = vcmp.lt.s32.totalorder %v474, 0
        %vm617 = vcmp.lt.s32.totalorder %v481, 0
        %vm618 = vcmp.lt.s32.totalorder %v488, 0
        %vm619 = vcmp.lt.s32.totalorder %v495, 0
        %vm620 = vcmp.lt.s32.totalorder %v502, 0
        %vm621 = vcmp.lt.s32.totalorder %v509, 0
        %vm622 = vcmp.lt.s32.totalorder %v516, 0
        %vm623 = vcmp.lt.s32.totalorder %v523, 0
        %vm624 = vcmp.lt.s32.totalorder %v530, 0
        %vm625 = vcmp.lt.s32.totalorder %v537, 0
        %vm626 = vcmp.lt.s32.totalorder %v544, 0
        %vm627 = vcmp.lt.s32.totalorder %v551, 0
        %vm628 = vcmp.lt.s32.totalorder %v558, 0
        %vm629 = vcmp.lt.s32.totalorder %v565, 0
        %vm630 = vmand %vm598, %vm566
        %vm631 = vmand %vm599, %vm567
        %vm632 = vmand %vm600, %vm568
        %vm633 = vmand %vm601, %vm569
        %vm634 = vmand %vm602, %vm570
        %vm635 = vmand %vm603, %vm571
        %vm636 = vmand %vm604, %vm572
        %vm637 = vmand %vm605, %vm573
        %vm638 = vmand %vm606, %vm574
        %vm639 = vmand %vm607, %vm575
        %vm640 = vmand %vm608, %vm576
        %vm641 = vmand %vm609, %vm577
        %vm642 = vmand %vm610, %vm578
        %vm643 = vmand %vm611, %vm579
        %vm644 = vmand %vm612, %vm580
        %vm645 = vmand %vm613, %vm581
        %vm646 = vmand %vm614, %vm582
        %vm647 = vmand %vm615, %vm583
        %vm648 = vmand %vm616, %vm584
        %vm649 = vmand %vm617, %vm585
        %vm650 = vmand %vm618, %vm586
        %vm651 = vmand %vm619, %vm587
        %vm652 = vmand %vm620, %vm588
        %vm653 = vmand %vm621, %vm589
        %vm654 = vmand %vm622, %vm590
        %vm655 = vmand %vm623, %vm591
        %vm656 = vmand %vm624, %vm592
        %vm657 = vmand %vm625, %vm593
        %vm658 = vmand %vm626, %vm594
        %vm659 = vmand %vm627, %vm595
        %vm660 = vmand %vm628, %vm596
        %vm661 = vmand %vm629, %vm597
        %v662 = vadd.s32 %v348, 16
        %v663 = vadd.s32 %v355, 16
        %v664 = vadd.s32 %v362, 16
        %v665 = vadd.s32 %v369, 16
        %v666 = vadd.s32 %v376, 16
        %v667 = vadd.s32 %v383, 16
        %v668 = vadd.s32 %v390, 16
        %v669 = vadd.s32 %v397, 16
        %v670 = vadd.s32 %v404, 16
        %v671 = vadd.s32 %v411, 16
        %v672 = vadd.s32 %v418, 16
        %v673 = vadd.s32 %v425, 16
        %v674 = vadd.s32 %v432, 16
        %v675 = vadd.s32 %v439, 16
        %v676 = vadd.s32 %v446, 16
        %v677 = vadd.s32 %v453, 16
        %v678 = vadd.s32 %v460, 16
        %v679 = vadd.s32 %v467, 16
        %v680 = vadd.s32 %v474, 16
        %v681 = vadd.s32 %v481, 16
        %v682 = vadd.s32 %v488, 16
        %v683 = vadd.s32 %v495, 16
        %v684 = vadd.s32 %v502, 16
        %v685 = vadd.s32 %v509, 16
        %v686 = vadd.s32 %v516, 16
        %v687 = vadd.s32 %v523, 16
        %v688 = vadd.s32 %v530, 16
        %v689 = vadd.s32 %v537, 16
        %v690 = vadd.s32 %v544, 16
        %v691 = vadd.s32 %v551, 16
        %v692 = vadd.s32 %v558, 16
        %v693 = vadd.s32 %v565, 16
        %v694 = vsel %vm630, %v662, %v348
        %v695 = vsel %vm631, %v663, %v355
        %v696 = vsel %vm632, %v664, %v362
        %v697 = vsel %vm633, %v665, %v369
        %v698 = vsel %vm634, %v666, %v376
        %v699 = vsel %vm635, %v667, %v383
        %v700 = vsel %vm636, %v668, %v390
        %v701 = vsel %vm637, %v669, %v397
        %v702 = vsel %vm638, %v670, %v404
        %v703 = vsel %vm639, %v671, %v411
        %v704 = vsel %vm640, %v672, %v418
        %v705 = vsel %vm641, %v673, %v425
        %v706 = vsel %vm642, %v674, %v432
        %v707 = vsel %vm643, %v675, %v439
        %v708 = vsel %vm644, %v676, %v446
        %v709 = vsel %vm645, %v677, %v453
        %v710 = vsel %vm646, %v678, %v460
        %v711 = vsel %vm647, %v679, %v467
        %v712 = vsel %vm648, %v680, %v474
        %v713 = vsel %vm649, %v681, %v481
        %v714 = vsel %vm650, %v682, %v488
        %v715 = vsel %vm651, %v683, %v495
        %v716 = vsel %vm652, %v684, %v502
        %v717 = vsel %vm653, %v685, %v509
        %v718 = vsel %vm654, %v686, %v516
        %v719 = vsel %vm655, %v687, %v523
        %v720 = vsel %vm656, %v688, %v530
        %v721 = vsel %vm657, %v689, %v537
        %v722 = vsel %vm658, %v690, %v544
        %v723 = vsel %vm659, %v691, %v551
        %v724 = vsel %vm660, %v692, %v558
        %v725 = vsel %vm661, %v693, %v565
        %vm726 = vcmp.gt.s32.totalorder %v694, 0
        %vm727 = vcmp.gt.s32.totalorder %v695, 0
        %vm728 = vcmp.gt.s32.totalorder %v696, 0
        %vm729 = vcmp.gt.s32.totalorder %v697, 0
        %vm730 = vcmp.gt.s32.totalorder %v698, 0
        %vm731 = vcmp.gt.s32.totalorder %v699, 0
        %vm732 = vcmp.gt.s32.totalorder %v700, 0
        %vm733 = vcmp.gt.s32.totalorder %v701, 0
        %vm734 = vcmp.gt.s32.totalorder %v702, 0
        %vm735 = vcmp.gt.s32.totalorder %v703, 0
        %vm736 = vcmp.gt.s32.totalorder %v704, 0
        %vm737 = vcmp.gt.s32.totalorder %v705, 0
        %vm738 = vcmp.gt.s32.totalorder %v706, 0
        %vm739 = vcmp.gt.s32.totalorder %v707, 0
        %vm740 = vcmp.gt.s32.totalorder %v708, 0
        %vm741 = vcmp.gt.s32.totalorder %v709, 0
        %vm742 = vcmp.gt.s32.totalorder %v710, 0
        %vm743 = vcmp.gt.s32.totalorder %v711, 0
        %vm744 = vcmp.gt.s32.totalorder %v712, 0
        %vm745 = vcmp.gt.s32.totalorder %v713, 0
        %vm746 = vcmp.gt.s32.totalorder %v714, 0
        %vm747 = vcmp.gt.s32.totalorder %v715, 0
        %vm748 = vcmp.gt.s32.totalorder %v716, 0
        %vm749 = vcmp.gt.s32.totalorder %v717, 0
        %vm750 = vcmp.gt.s32.totalorder %v718, 0
        %vm751 = vcmp.gt.s32.totalorder %v719, 0
        %vm752 = vcmp.gt.s32.totalorder %v720, 0
        %vm753 = vcmp.gt.s32.totalorder %v721, 0
        %vm754 = vcmp.gt.s32.totalorder %v722, 0
        %vm755 = vcmp.gt.s32.totalorder %v723, 0
        %vm756 = vcmp.gt.s32.totalorder %v724, 0
        %vm757 = vcmp.gt.s32.totalorder %v725, 0
        %vm758 = vcmp.lt.s32.totalorder %v694, 15
        %vm759 = vcmp.lt.s32.totalorder %v695, 15
        %vm760 = vcmp.lt.s32.totalorder %v696, 15
        %vm761 = vcmp.lt.s32.totalorder %v697, 15
        %vm762 = vcmp.lt.s32.totalorder %v698, 15
        %vm763 = vcmp.lt.s32.totalorder %v699, 15
        %vm764 = vcmp.lt.s32.totalorder %v700, 15
        %vm765 = vcmp.lt.s32.totalorder %v701, 15
        %vm766 = vcmp.lt.s32.totalorder %v702, 15
        %vm767 = vcmp.lt.s32.totalorder %v703, 15
        %vm768 = vcmp.lt.s32.totalorder %v704, 15
        %vm769 = vcmp.lt.s32.totalorder %v705, 15
        %vm770 = vcmp.lt.s32.totalorder %v706, 15
        %vm771 = vcmp.lt.s32.totalorder %v707, 15
        %vm772 = vcmp.lt.s32.totalorder %v708, 15
        %vm773 = vcmp.lt.s32.totalorder %v709, 15
        %vm774 = vcmp.lt.s32.totalorder %v710, 15
        %vm775 = vcmp.lt.s32.totalorder %v711, 15
        %vm776 = vcmp.lt.s32.totalorder %v712, 15
        %vm777 = vcmp.lt.s32.totalorder %v713, 15
        %vm778 = vcmp.lt.s32.totalorder %v714, 15
        %vm779 = vcmp.lt.s32.totalorder %v715, 15
        %vm780 = vcmp.lt.s32.totalorder %v716, 15
        %vm781 = vcmp.lt.s32.totalorder %v717, 15
        %vm782 = vcmp.lt.s32.totalorder %v718, 15
        %vm783 = vcmp.lt.s32.totalorder %v719, 15
        %vm784 = vcmp.lt.s32.totalorder %v720, 15
        %vm785 = vcmp.lt.s32.totalorder %v721, 15
        %vm786 = vcmp.lt.s32.totalorder %v722, 15
        %vm787 = vcmp.lt.s32.totalorder %v723, 15
        %vm788 = vcmp.lt.s32.totalorder %v724, 15
        %vm789 = vcmp.lt.s32.totalorder %v725, 15
        %v790 = vld [vmem:[#allocation2 + $0x8] sm:$0xff]
        %v791 = vld [vmem:[#allocation2 + $0x10] sm:$0xff]
        %v792 = vld [vmem:[#allocation2 + $0x18] sm:$0xff]
        %v793 = vld [vmem:[#allocation2 + $0x20] sm:$0xff]
        %v794 = vld [vmem:[#allocation2 + $0x28] sm:$0xff]
        %v795 = vld [vmem:[#allocation2 + $0x30] sm:$0xff]
        %v796 = vld [vmem:[#allocation2 + $0x38] sm:$0xff]
        %v797 = vld [vmem:[#allocation2 + $0x40] sm:$0xff]
        %v798 = vld [vmem:[#allocation2 + $0x48] sm:$0xff]
        %v799 = vld [vmem:[#allocation2 + $0x50] sm:$0xff]
        %v800 = vld [vmem:[#allocation2 + $0x58] sm:$0xff]
        %v801 = vld [vmem:[#allocation2 + $0x60] sm:$0xff]
        %v802 = vld [vmem:[#allocation2 + $0x68] sm:$0xff]
        %v803 = vld [vmem:[#allocation2 + $0x70] sm:$0xff]
        %v804 = vld [vmem:[#allocation2 + $0x78] sm:$0xff]
        %v805 = vld [vmem:[#allocation2 + $0x80] sm:$0xff]
        %v806 = vld [vmem:[#allocation2 + $0x88] sm:$0xff]
        %v807 = vld [vmem:[#allocation2 + $0x90] sm:$0xff]
        %v808 = vld [vmem:[#allocation2 + $0x98] sm:$0xff]
        %v809 = vld [vmem:[#allocation2 + $0xa0] sm:$0xff]
        %v810 = vld [vmem:[#allocation2 + $0xa8] sm:$0xff]
        %v811 = vld [vmem:[#allocation2 + $0xb0] sm:$0xff]
        %v812 = vld [vmem:[#allocation2 + $0xb8] sm:$0xff]
        %v813 = vld [vmem:[#allocation2 + $0xc0] sm:$0xff]
        %v814 = vld [vmem:[#allocation2 + $0xc8] sm:$0xff]
        %v815 = vld [vmem:[#allocation2 + $0xd0] sm:$0xff]
        %v816 = vld [vmem:[#allocation2 + $0xd8] sm:$0xff]
        %v817 = vld [vmem:[#allocation2 + $0xe0] sm:$0xff]
        %v818 = vld [vmem:[#allocation2 + $0xe8] sm:$0xff]
        %v819 = vld [vmem:[#allocation2 + $0xf0] sm:$0xff]
        %v820 = vld [vmem:[#allocation2 + $0xf8] sm:$0xff]
        %v821 = vld [vmem:[#allocation2 + $0x100] sm:$0xff]
        %v822 = vlaneseq
        %v823 = vshrl.u32 %v822, 7
        %v824 = vsub.s32 1, %v823
        %v825 = vrot.slane %v307, %v824
        %v826 = vmul.f32 %v790, %v825
        %v827 = vmul.f32 %v791, %v825
        %v828 = vmul.f32 %v792, %v825
        %v829 = vmul.f32 %v793, %v825
        %v830 = vmul.f32 %v794, %v825
        %v831 = vmul.f32 %v795, %v825
        %v832 = vmul.f32 %v796, %v825
        %v833 = vmul.f32 %v797, %v825
        %v834 = vmul.f32 %v798, %v825
        %v835 = vmul.f32 %v799, %v825
        %v836 = vmul.f32 %v800, %v825
        %v837 = vmul.f32 %v801, %v825
        %v838 = vmul.f32 %v802, %v825
        %v839 = vmul.f32 %v803, %v825
        %v840 = vmul.f32 %v804, %v825
        %v841 = vmul.f32 %v805, %v825
        %v842 = vmul.f32 %v806, %v825
        %v843 = vmul.f32 %v807, %v825
        %v844 = vmul.f32 %v808, %v825
        %v845 = vmul.f32 %v809, %v825
        %v846 = vmul.f32 %v810, %v825
        %v847 = vmul.f32 %v811, %v825
        %v848 = vmul.f32 %v812, %v825
        %v849 = vmul.f32 %v813, %v825
        %v850 = vmul.f32 %v814, %v825
        %v851 = vmul.f32 %v815, %v825
        %v852 = vmul.f32 %v816, %v825
        %v853 = vmul.f32 %v817, %v825
        %v854 = vmul.f32 %v818, %v825
        %v855 = vmul.f32 %v819, %v825
        %v856 = vmul.f32 %v820, %v825
        %v857 = vmul.f32 %v821, %v825
        %v858 = vld [vmem:[#allocation2 + $0x108] sm:$0xff]
        %v859 = vld [vmem:[#allocation2 + $0x110] sm:$0xff]
        %v860 = vlaneseq
        %v861 = vshrl.u32 %v860, 7
        %v862 = vsub.s32 4, %v861
        %v863 = vrot.slane %v307, %v862
        %v864 = vmul.f32 %v792, %v863
        %v865 = vmul.f32 %v793, %v863
        %v866 = vmul.f32 %v794, %v863
        %v867 = vmul.f32 %v795, %v863
        %v868 = vmul.f32 %v796, %v863
        %v869 = vmul.f32 %v797, %v863
        %v870 = vmul.f32 %v798, %v863
        %v871 = vmul.f32 %v799, %v863
        %v872 = vmul.f32 %v800, %v863
        %v873 = vmul.f32 %v801, %v863
        %v874 = vmul.f32 %v802, %v863
        %v875 = vmul.f32 %v803, %v863
        %v876 = vmul.f32 %v804, %v863
        %v877 = vmul.f32 %v805, %v863
        %v878 = vmul.f32 %v806, %v863
        %v879 = vmul.f32 %v807, %v863
        %v880 = vmul.f32 %v808, %v863
        %v881 = vmul.f32 %v809, %v863
        %v882 = vmul.f32 %v810, %v863
        %v883 = vmul.f32 %v811, %v863
        %v884 = vmul.f32 %v812, %v863
        %v885 = vmul.f32 %v813, %v863
        %v886 = vmul.f32 %v814, %v863
        %v887 = vmul.f32 %v815, %v863
        %v888 = vmul.f32 %v816, %v863
        %v889 = vmul.f32 %v817, %v863
        %v890 = vmul.f32 %v818, %v863
        %v891 = vmul.f32 %v819, %v863
        %v892 = vmul.f32 %v820, %v863
        %v893 = vmul.f32 %v821, %v863
        %v894 = vmul.f32 %v858, %v863
        %v895 = vmul.f32 %v859, %v863
        %v896 = vadd.f32 %v826, %v864
        %v897 = vadd.f32 %v827, %v865
        %v898 = vadd.f32 %v828, %v866
        %v899 = vadd.f32 %v829, %v867
        %v900 = vadd.f32 %v830, %v868
        %v901 = vadd.f32 %v831, %v869
        %v902 = vadd.f32 %v832, %v870
        %v903 = vadd.f32 %v833, %v871
        %v904 = vadd.f32 %v834, %v872
        %v905 = vadd.f32 %v835, %v873
        %v906 = vadd.f32 %v836, %v874
        %v907 = vadd.f32 %v837, %v875
        %v908 = vadd.f32 %v838, %v876
        %v909 = vadd.f32 %v839, %v877
        %v910 = vadd.f32 %v840, %v878
        %v911 = vadd.f32 %v841, %v879
        %v912 = vadd.f32 %v842, %v880
        %v913 = vadd.f32 %v843, %v881
        %v914 = vadd.f32 %v844, %v882
        %v915 = vadd.f32 %v845, %v883
        %v916 = vadd.f32 %v846, %v884
        %v917 = vadd.f32 %v847, %v885
        %v918 = vadd.f32 %v848, %v886
        %v919 = vadd.f32 %v849, %v887
        %v920 = vadd.f32 %v850, %v888
        %v921 = vadd.f32 %v851, %v889
        %v922 = vadd.f32 %v852, %v890
        %v923 = vadd.f32 %v853, %v891
        %v924 = vadd.f32 %v854, %v892
        %v925 = vadd.f32 %v855, %v893
        %v926 = vadd.f32 %v856, %v894
        %v927 = vadd.f32 %v857, %v895
        %v928 = vld [vmem:[#allocation2 + $0x118] sm:$0xff]
        %v929 = vld [vmem:[#allocation2 + $0x120] sm:$0xff]
        %v930 = vlaneseq
        %v931 = vshrl.u32 %v930, 7
        %v932 = vsub.s32 7, %v931
        %v933 = vrot.slane %v307, %v932
        %v934 = vmul.f32 %v794, %v933
        %v935 = vmul.f32 %v795, %v933
        %v936 = vmul.f32 %v796, %v933
        %v937 = vmul.f32 %v797, %v933
        %v938 = vmul.f32 %v798, %v933
        %v939 = vmul.f32 %v799, %v933
        %v940 = vmul.f32 %v800, %v933
        %v941 = vmul.f32 %v801, %v933
        %v942 = vmul.f32 %v802, %v933
        %v943 = vmul.f32 %v803, %v933
        %v944 = vmul.f32 %v804, %v933
        %v945 = vmul.f32 %v805, %v933
        %v946 = vmul.f32 %v806, %v933
        %v947 = vmul.f32 %v807, %v933
        %v948 = vmul.f32 %v808, %v933
        %v949 = vmul.f32 %v809, %v933
        %v950 = vmul.f32 %v810, %v933
        %v951 = vmul.f32 %v811, %v933
        %v952 = vmul.f32 %v812, %v933
        %v953 = vmul.f32 %v813, %v933
        %v954 = vmul.f32 %v814, %v933
        %v955 = vmul.f32 %v815, %v933
        %v956 = vmul.f32 %v816, %v933
        %v957 = vmul.f32 %v817, %v933
        %v958 = vmul.f32 %v818, %v933
        %v959 = vmul.f32 %v819, %v933
        %v960 = vmul.f32 %v820, %v933
        %v961 = vmul.f32 %v821, %v933
        %v962 = vmul.f32 %v858, %v933
        %v963 = vmul.f32 %v859, %v933
        %v964 = vmul.f32 %v928, %v933
        %v965 = vmul.f32 %v929, %v933
        %v966 = vadd.f32 %v896, %v934
        %v967 = vadd.f32 %v897, %v935
        %v968 = vadd.f32 %v898, %v936
        %v969 = vadd.f32 %v899, %v937
        %v970 = vadd.f32 %v900, %v938
        %v971 = vadd.f32 %v901, %v939
        %v972 = vadd.f32 %v902, %v940
        %v973 = vadd.f32 %v903, %v941
        %v974 = vadd.f32 %v904, %v942
        %v975 = vadd.f32 %v905, %v943
        %v976 = vadd.f32 %v906, %v944
        %v977 = vadd.f32 %v907, %v945
        %v978 = vadd.f32 %v908, %v946
        %v979 = vadd.f32 %v909, %v947
        %v980 = vadd.f32 %v910, %v948
        %v981 = vadd.f32 %v911, %v949
        %v982 = vadd.f32 %v912, %v950
        %v983 = vadd.f32 %v913, %v951
        %v984 = vadd.f32 %v914, %v952
        %v985 = vadd.f32 %v915, %v953
        %v986 = vadd.f32 %v916, %v954
        %v987 = vadd.f32 %v917, %v955
        %v988 = vadd.f32 %v918, %v956
        %v989 = vadd.f32 %v919, %v957
        %v990 = vadd.f32 %v920, %v958
        %v991 = vadd.f32 %v921, %v959
        %v992 = vadd.f32 %v922, %v960
        %v993 = vadd.f32 %v923, %v961
        %v994 = vadd.f32 %v924, %v962
        %v995 = vadd.f32 %v925, %v963
        %v996 = vadd.f32 %v926, %v964
        %v997 = vadd.f32 %v927, %v965
        %v998 = vld [vmem:[#allocation2 + $0x7] sm:$0xff]
        %v999 = vld [vmem:[#allocation2 + $0xf] sm:$0xff]
        %v1000 = vld [vmem:[#allocation2 + $0x17] sm:$0xff]
        %v1001 = vld [vmem:[#allocation2 + $0x1f] sm:$0xff]
        %v1002 = vld [vmem:[#allocation2 + $0x27] sm:$0xff]
        %v1003 = vld [vmem:[#allocation2 + $0x2f] sm:$0xff]
        %v1004 = vld [vmem:[#allocation2 + $0x37] sm:$0xff]
        %v1005 = vld [vmem:[#allocation2 + $0x3f] sm:$0xff]
        %v1006 = vld [vmem:[#allocation2 + $0x47] sm:$0xff]
        %v1007 = vld [vmem:[#allocation2 + $0x4f] sm:$0xff]
        %v1008 = vld [vmem:[#allocation2 + $0x57] sm:$0xff]
        %v1009 = vld [vmem:[#allocation2 + $0x5f] sm:$0xff]
        %v1010 = vld [vmem:[#allocation2 + $0x67] sm:$0xff]
        %v1011 = vld [vmem:[#allocation2 + $0x6f] sm:$0xff]
        %v1012 = vld [vmem:[#allocation2 + $0x77] sm:$0xff]
        %v1013 = vld [vmem:[#allocation2 + $0x7f] sm:$0xff]
        %v1014 = vld [vmem:[#allocation2 + $0x87] sm:$0xff]
        %v1015 = vld [vmem:[#allocation2 + $0x8f] sm:$0xff]
        %v1016 = vld [vmem:[#allocation2 + $0x97] sm:$0xff]
        %v1017 = vld [vmem:[#allocation2 + $0x9f] sm:$0xff]
        %v1018 = vld [vmem:[#allocation2 + $0xa7] sm:$0xff]
        %v1019 = vld [vmem:[#allocation2 + $0xaf] sm:$0xff]
        %v1020 = vld [vmem:[#allocation2 + $0xb7] sm:$0xff]
        %v1021 = vld [vmem:[#allocation2 + $0xbf] sm:$0xff]
        %v1022 = vld [vmem:[#allocation2 + $0xc7] sm:$0xff]
        %v1023 = vld [vmem:[#allocation2 + $0xcf] sm:$0xff]
        %v1024 = vld [vmem:[#allocation2 + $0xd7] sm:$0xff]
        %v1025 = vld [vmem:[#allocation2 + $0xdf] sm:$0xff]
        %v1026 = vld [vmem:[#allocation2 + $0xe7] sm:$0xff]
        %v1027 = vld [vmem:[#allocation2 + $0xef] sm:$0xff]
        %v1028 = vld [vmem:[#allocation2 + $0xf7] sm:$0xff]
        %v1029 = vld [vmem:[#allocation2 + $0xff] sm:$0xff]
        %v1030 = vlaneseq
        %v1031 = vshrl.u32 %v1030, 7
        %v1032 = vsub.s32 0, %v1031
        %v1033 = vrot.slane %v307, %v1032
        %v1034 = vmul.f32 %v998, %v1033
        %v1035 = vmul.f32 %v999, %v1033
        %v1036 = vmul.f32 %v1000, %v1033
        %v1037 = vmul.f32 %v1001, %v1033
        %v1038 = vmul.f32 %v1002, %v1033
        %v1039 = vmul.f32 %v1003, %v1033
        %v1040 = vmul.f32 %v1004, %v1033
        %v1041 = vmul.f32 %v1005, %v1033
        %v1042 = vmul.f32 %v1006, %v1033
        %v1043 = vmul.f32 %v1007, %v1033
        %v1044 = vmul.f32 %v1008, %v1033
        %v1045 = vmul.f32 %v1009, %v1033
        %v1046 = vmul.f32 %v1010, %v1033
        %v1047 = vmul.f32 %v1011, %v1033
        %v1048 = vmul.f32 %v1012, %v1033
        %v1049 = vmul.f32 %v1013, %v1033
        %v1050 = vmul.f32 %v1014, %v1033
        %v1051 = vmul.f32 %v1015, %v1033
        %v1052 = vmul.f32 %v1016, %v1033
        %v1053 = vmul.f32 %v1017, %v1033
        %v1054 = vmul.f32 %v1018, %v1033
        %v1055 = vmul.f32 %v1019, %v1033
        %v1056 = vmul.f32 %v1020, %v1033
        %v1057 = vmul.f32 %v1021, %v1033
        %v1058 = vmul.f32 %v1022, %v1033
        %v1059 = vmul.f32 %v1023, %v1033
        %v1060 = vmul.f32 %v1024, %v1033
        %v1061 = vmul.f32 %v1025, %v1033
        %v1062 = vmul.f32 %v1026, %v1033
        %v1063 = vmul.f32 %v1027, %v1033
        %v1064 = vmul.f32 %v1028, %v1033
        %v1065 = vmul.f32 %v1029, %v1033
        %v1066 = vld [vmem:[#allocation2 + $0x107] sm:$0xff]
        %v1067 = vld [vmem:[#allocation2 + $0x10f] sm:$0xff]
        %v1068 = vlaneseq
        %v1069 = vshrl.u32 %v1068, 7
        %v1070 = vsub.s32 3, %v1069
        %v1071 = vrot.slane %v307, %v1070
        %v1072 = vmul.f32 %v1000, %v1071
        %v1073 = vmul.f32 %v1001, %v1071
        %v1074 = vmul.f32 %v1002, %v1071
        %v1075 = vmul.f32 %v1003, %v1071
        %v1076 = vmul.f32 %v1004, %v1071
        %v1077 = vmul.f32 %v1005, %v1071
        %v1078 = vmul.f32 %v1006, %v1071
        %v1079 = vmul.f32 %v1007, %v1071
        %v1080 = vmul.f32 %v1008, %v1071
        %v1081 = vmul.f32 %v1009, %v1071
        %v1082 = vmul.f32 %v1010, %v1071
        %v1083 = vmul.f32 %v1011, %v1071
        %v1084 = vmul.f32 %v1012, %v1071
        %v1085 = vmul.f32 %v1013, %v1071
        %v1086 = vmul.f32 %v1014, %v1071
        %v1087 = vmul.f32 %v1015, %v1071
        %v1088 = vmul.f32 %v1016, %v1071
        %v1089 = vmul.f32 %v1017, %v1071
        %v1090 = vmul.f32 %v1018, %v1071
        %v1091 = vmul.f32 %v1019, %v1071
        %v1092 = vmul.f32 %v1020, %v1071
        %v1093 = vmul.f32 %v1021, %v1071
        %v1094 = vmul.f32 %v1022, %v1071
        %v1095 = vmul.f32 %v1023, %v1071
        %v1096 = vmul.f32 %v1024, %v1071
        %v1097 = vmul.f32 %v1025, %v1071
        %v1098 = vmul.f32 %v1026, %v1071
        %v1099 = vmul.f32 %v1027, %v1071
        %v1100 = vmul.f32 %v1028, %v1071
        %v1101 = vmul.f32 %v1029, %v1071
        %v1102 = vmul.f32 %v1066, %v1071
        %v1103 = vmul.f32 %v1067, %v1071
        %v1104 = vadd.f32 %v1034, %v1072
        %v1105 = vadd.f32 %v1035, %v1073
        %v1106 = vadd.f32 %v1036, %v1074
        %v1107 = vadd.f32 %v1037, %v1075
        %v1108 = vadd.f32 %v1038, %v1076
        %v1109 = vadd.f32 %v1039, %v1077
        %v1110 = vadd.f32 %v1040, %v1078
        %v1111 = vadd.f32 %v1041, %v1079
        %v1112 = vadd.f32 %v1042, %v1080
        %v1113 = vadd.f32 %v1043, %v1081
        %v1114 = vadd.f32 %v1044, %v1082
        %v1115 = vadd.f32 %v1045, %v1083
        %v1116 = vadd.f32 %v1046, %v1084
        %v1117 = vadd.f32 %v1047, %v1085
        %v1118 = vadd.f32 %v1048, %v1086
        %v1119 = vadd.f32 %v1049, %v1087
        %v1120 = vadd.f32 %v1050, %v1088
        %v1121 = vadd.f32 %v1051, %v1089
        %v1122 = vadd.f32 %v1052, %v1090
        %v1123 = vadd.f32 %v1053, %v1091
        %v1124 = vadd.f32 %v1054, %v1092
        %v1125 = vadd.f32 %v1055, %v1093
        %v1126 = vadd.f32 %v1056, %v1094
        %v1127 = vadd.f32 %v1057, %v1095
        %v1128 = vadd.f32 %v1058, %v1096
        %v1129 = vadd.f32 %v1059, %v1097
        %v1130 = vadd.f32 %v1060, %v1098
        %v1131 = vadd.f32 %v1061, %v1099
        %v1132 = vadd.f32 %v1062, %v1100
        %v1133 = vadd.f32 %v1063, %v1101
        %v1134 = vadd.f32 %v1064, %v1102
        %v1135 = vadd.f32 %v1065, %v1103
        %v1136 = vld [vmem:[#allocation2 + $0x117] sm:$0xff]
        %v1137 = vld [vmem:[#allocation2 + $0x11f] sm:$0xff]
        %v1138 = vlaneseq
        %v1139 = vshrl.u32 %v1138, 7
        %v1140 = vsub.s32 6, %v1139
        %v1141 = vrot.slane %v307, %v1140
        %v1142 = vmul.f32 %v1002, %v1141
        %v1143 = vmul.f32 %v1003, %v1141
        %v1144 = vmul.f32 %v1004, %v1141
        %v1145 = vmul.f32 %v1005, %v1141
        %v1146 = vmul.f32 %v1006, %v1141
        %v1147 = vmul.f32 %v1007, %v1141
        %v1148 = vmul.f32 %v1008, %v1141
        %v1149 = vmul.f32 %v1009, %v1141
        %v1150 = vmul.f32 %v1010, %v1141
        %v1151 = vmul.f32 %v1011, %v1141
        %v1152 = vmul.f32 %v1012, %v1141
        %v1153 = vmul.f32 %v1013, %v1141
        %v1154 = vmul.f32 %v1014, %v1141
        %v1155 = vmul.f32 %v1015, %v1141
        %v1156 = vmul.f32 %v1016, %v1141
        %v1157 = vmul.f32 %v1017, %v1141
        %v1158 = vmul.f32 %v1018, %v1141
        %v1159 = vmul.f32 %v1019, %v1141
        %v1160 = vmul.f32 %v1020, %v1141
        %v1161 = vmul.f32 %v1021, %v1141
        %v1162 = vmul.f32 %v1022, %v1141
        %v1163 = vmul.f32 %v1023, %v1141
        %v1164 = vmul.f32 %v1024, %v1141
        %v1165 = vmul.f32 %v1025, %v1141
        %v1166 = vmul.f32 %v1026, %v1141
        %v1167 = vmul.f32 %v1027, %v1141
        %v1168 = vmul.f32 %v1028, %v1141
        %v1169 = vmul.f32 %v1029, %v1141
        %v1170 = vmul.f32 %v1066, %v1141
        %v1171 = vmul.f32 %v1067, %v1141
        %v1172 = vmul.f32 %v1136, %v1141
        %v1173 = vmul.f32 %v1137, %v1141
        %v1174 = vadd.f32 %v1104, %v1142
        %v1175 = vadd.f32 %v1105, %v1143
        %v1176 = vadd.f32 %v1106, %v1144
        %v1177 = vadd.f32 %v1107, %v1145
        %v1178 = vadd.f32 %v1108, %v1146
        %v1179 = vadd.f32 %v1109, %v1147
        %v1180 = vadd.f32 %v1110, %v1148
        %v1181 = vadd.f32 %v1111, %v1149
        %v1182 = vadd.f32 %v1112, %v1150
        %v1183 = vadd.f32 %v1113, %v1151
        %v1184 = vadd.f32 %v1114, %v1152
        %v1185 = vadd.f32 %v1115, %v1153
        %v1186 = vadd.f32 %v1116, %v1154
        %v1187 = vadd.f32 %v1117, %v1155
        %v1188 = vadd.f32 %v1118, %v1156
        %v1189 = vadd.f32 %v1119, %v1157
        %v1190 = vadd.f32 %v1120, %v1158
        %v1191 = vadd.f32 %v1121, %v1159
        %v1192 = vadd.f32 %v1122, %v1160
        %v1193 = vadd.f32 %v1123, %v1161
        %v1194 = vadd.f32 %v1124, %v1162
        %v1195 = vadd.f32 %v1125, %v1163
        %v1196 = vadd.f32 %v1126, %v1164
        %v1197 = vadd.f32 %v1127, %v1165
        %v1198 = vadd.f32 %v1128, %v1166
        %v1199 = vadd.f32 %v1129, %v1167
        %v1200 = vadd.f32 %v1130, %v1168
        %v1201 = vadd.f32 %v1131, %v1169
        %v1202 = vadd.f32 %v1132, %v1170
        %v1203 = vadd.f32 %v1133, %v1171
        %v1204 = vadd.f32 %v1134, %v1172
        %v1205 = vadd.f32 %v1135, %v1173
        %v1206 = vsel %vm726, 1, 0
        %v1207 = vsel %vm727, 1, 0
        %v1208 = vsel %vm728, 1, 0
        %v1209 = vsel %vm729, 1, 0
        %v1210 = vsel %vm730, 1, 0
        %v1211 = vsel %vm731, 1, 0
        %v1212 = vsel %vm732, 1, 0
        %v1213 = vsel %vm733, 1, 0
        %v1214 = vsel %vm734, 1, 0
        %v1215 = vsel %vm735, 1, 0
        %v1216 = vsel %vm736, 1, 0
        %v1217 = vsel %vm737, 1, 0
        %v1218 = vsel %vm738, 1, 0
        %v1219 = vsel %vm739, 1, 0
        %v1220 = vsel %vm740, 1, 0
        %v1221 = vsel %vm741, 1, 0
        %v1222 = vsel %vm742, 1, 0
        %v1223 = vsel %vm743, 1, 0
        %v1224 = vsel %vm744, 1, 0
        %v1225 = vsel %vm745, 1, 0
        %v1226 = vsel %vm746, 1, 0
        %v1227 = vsel %vm747, 1, 0
        %v1228 = vsel %vm748, 1, 0
        %v1229 = vsel %vm749, 1, 0
        %v1230 = vsel %vm750, 1, 0
        %v1231 = vsel %vm751, 1, 0
        %v1232 = vsel %vm752, 1, 0
        %v1233 = vsel %vm753, 1, 0
        %v1234 = vsel %vm754, 1, 0
        %v1235 = vsel %vm755, 1, 0
        %v1236 = vsel %vm756, 1, 0
        %v1237 = vsel %vm757, 1, 0
        %vm1238 = vcmp.eq.s32.totalorder %v1206, 1
        %vm1239 = vcmp.eq.s32.totalorder %v1207, 1
        %vm1240 = vcmp.eq.s32.totalorder %v1208, 1
        %vm1241 = vcmp.eq.s32.totalorder %v1209, 1
        %vm1242 = vcmp.eq.s32.totalorder %v1210, 1
        %vm1243 = vcmp.eq.s32.totalorder %v1211, 1
        %vm1244 = vcmp.eq.s32.totalorder %v1212, 1
        %vm1245 = vcmp.eq.s32.totalorder %v1213, 1
        %vm1246 = vcmp.eq.s32.totalorder %v1214, 1
        %vm1247 = vcmp.eq.s32.totalorder %v1215, 1
        %vm1248 = vcmp.eq.s32.totalorder %v1216, 1
        %vm1249 = vcmp.eq.s32.totalorder %v1217, 1
        %vm1250 = vcmp.eq.s32.totalorder %v1218, 1
        %vm1251 = vcmp.eq.s32.totalorder %v1219, 1
        %vm1252 = vcmp.eq.s32.totalorder %v1220, 1
        %vm1253 = vcmp.eq.s32.totalorder %v1221, 1
        %vm1254 = vcmp.eq.s32.totalorder %v1222, 1
        %vm1255 = vcmp.eq.s32.totalorder %v1223, 1
        %vm1256 = vcmp.eq.s32.totalorder %v1224, 1
        %vm1257 = vcmp.eq.s32.totalorder %v1225, 1
        %vm1258 = vcmp.eq.s32.totalorder %v1226, 1
        %vm1259 = vcmp.eq.s32.totalorder %v1227, 1
        %vm1260 = vcmp.eq.s32.totalorder %v1228, 1
        %vm1261 = vcmp.eq.s32.totalorder %v1229, 1
        %vm1262 = vcmp.eq.s32.totalorder %v1230, 1
        %vm1263 = vcmp.eq.s32.totalorder %v1231, 1
        %vm1264 = vcmp.eq.s32.totalorder %v1232, 1
        %vm1265 = vcmp.eq.s32.totalorder %v1233, 1
        %vm1266 = vcmp.eq.s32.totalorder %v1234, 1
        %vm1267 = vcmp.eq.s32.totalorder %v1235, 1
        %vm1268 = vcmp.eq.s32.totalorder %v1236, 1
        %vm1269 = vcmp.eq.s32.totalorder %v1237, 1
        %v1270 = vsel %vm1238, %v1174, 0.0
        %v1271 = vsel %vm1239, %v1175, 0.0
        %v1272 = vsel %vm1240, %v1176, 0.0
        %v1273 = vsel %vm1241, %v1177, 0.0
        %v1274 = vsel %vm1242, %v1178, 0.0
        %v1275 = vsel %vm1243, %v1179, 0.0
        %v1276 = vsel %vm1244, %v1180, 0.0
        %v1277 = vsel %vm1245, %v1181, 0.0
        %v1278 = vsel %vm1246, %v1182, 0.0
        %v1279 = vsel %vm1247, %v1183, 0.0
        %v1280 = vsel %vm1248, %v1184, 0.0
        %v1281 = vsel %vm1249, %v1185, 0.0
        %v1282 = vsel %vm1250, %v1186, 0.0
        %v1283 = vsel %vm1251, %v1187, 0.0
        %v1284 = vsel %vm1252, %v1188, 0.0
        %v1285 = vsel %vm1253, %v1189, 0.0
        %v1286 = vsel %vm1254, %v1190, 0.0
        %v1287 = vsel %vm1255, %v1191, 0.0
        %v1288 = vsel %vm1256, %v1192, 0.0
        %v1289 = vsel %vm1257, %v1193, 0.0
        %v1290 = vsel %vm1258, %v1194, 0.0
        %v1291 = vsel %vm1259, %v1195, 0.0
        %v1292 = vsel %vm1260, %v1196, 0.0
        %v1293 = vsel %vm1261, %v1197, 0.0
        %v1294 = vsel %vm1262, %v1198, 0.0
        %v1295 = vsel %vm1263, %v1199, 0.0
        %v1296 = vsel %vm1264, %v1200, 0.0
        %v1297 = vsel %vm1265, %v1201, 0.0
        %v1298 = vsel %vm1266, %v1202, 0.0
        %v1299 = vsel %vm1267, %v1203, 0.0
        %v1300 = vsel %vm1268, %v1204, 0.0
        %v1301 = vsel %vm1269, %v1205, 0.0
        %v1302 = vld [vmem:[#allocation2 + $0x9] sm:$0xff]
        %v1303 = vld [vmem:[#allocation2 + $0x11] sm:$0xff]
        %v1304 = vld [vmem:[#allocation2 + $0x19] sm:$0xff]
        %v1305 = vld [vmem:[#allocation2 + $0x21] sm:$0xff]
        %v1306 = vld [vmem:[#allocation2 + $0x29] sm:$0xff]
        %v1307 = vld [vmem:[#allocation2 + $0x31] sm:$0xff]
        %v1308 = vld [vmem:[#allocation2 + $0x39] sm:$0xff]
        %v1309 = vld [vmem:[#allocation2 + $0x41] sm:$0xff]
        %v1310 = vld [vmem:[#allocation2 + $0x49] sm:$0xff]
        %v1311 = vld [vmem:[#allocation2 + $0x51] sm:$0xff]
        %v1312 = vld [vmem:[#allocation2 + $0x59] sm:$0xff]
        %v1313 = vld [vmem:[#allocation2 + $0x61] sm:$0xff]
        %v1314 = vld [vmem:[#allocation2 + $0x69] sm:$0xff]
        %v1315 = vld [vmem:[#allocation2 + $0x71] sm:$0xff]
        %v1316 = vld [vmem:[#allocation2 + $0x79] sm:$0xff]
        %v1317 = vld [vmem:[#allocation2 + $0x81] sm:$0xff]
        %v1318 = vld [vmem:[#allocation2 + $0x89] sm:$0xff]
        %v1319 = vld [vmem:[#allocation2 + $0x91] sm:$0xff]
        %v1320 = vld [vmem:[#allocation2 + $0x99] sm:$0xff]
        %v1321 = vld [vmem:[#allocation2 + $0xa1] sm:$0xff]
        %v1322 = vld [vmem:[#allocation2 + $0xa9] sm:$0xff]
        %v1323 = vld [vmem:[#allocation2 + $0xb1] sm:$0xff]
        %v1324 = vld [vmem:[#allocation2 + $0xb9] sm:$0xff]
        %v1325 = vld [vmem:[#allocation2 + $0xc1] sm:$0xff]
        %v1326 = vld [vmem:[#allocation2 + $0xc9] sm:$0xff]
        %v1327 = vld [vmem:[#allocation2 + $0xd1] sm:$0xff]
        %v1328 = vld [vmem:[#allocation2 + $0xd9] sm:$0xff]
        %v1329 = vld [vmem:[#allocation2 + $0xe1] sm:$0xff]
        %v1330 = vld [vmem:[#allocation2 + $0xe9] sm:$0xff]
        %v1331 = vld [vmem:[#allocation2 + $0xf1] sm:$0xff]
        %v1332 = vld [vmem:[#allocation2 + $0xf9] sm:$0xff]
        %v1333 = vld [vmem:[#allocation2 + $0x101] sm:$0xff]
        %v1334 = vlaneseq
        %v1335 = vshrl.u32 %v1334, 7
        %v1336 = vsub.s32 2, %v1335
        %v1337 = vrot.slane %v307, %v1336
        %v1338 = vmul.f32 %v1302, %v1337
        %v1339 = vmul.f32 %v1303, %v1337
        %v1340 = vmul.f32 %v1304, %v1337
        %v1341 = vmul.f32 %v1305, %v1337
        %v1342 = vmul.f32 %v1306, %v1337
        %v1343 = vmul.f32 %v1307, %v1337
        %v1344 = vmul.f32 %v1308, %v1337
        %v1345 = vmul.f32 %v1309, %v1337
        %v1346 = vmul.f32 %v1310, %v1337
        %v1347 = vmul.f32 %v1311, %v1337
        %v1348 = vmul.f32 %v1312, %v1337
        %v1349 = vmul.f32 %v1313, %v1337
        %v1350 = vmul.f32 %v1314, %v1337
        %v1351 = vmul.f32 %v1315, %v1337
        %v1352 = vmul.f32 %v1316, %v1337
        %v1353 = vmul.f32 %v1317, %v1337
        %v1354 = vmul.f32 %v1318, %v1337
        %v1355 = vmul.f32 %v1319, %v1337
        %v1356 = vmul.f32 %v1320, %v1337
        %v1357 = vmul.f32 %v1321, %v1337
        %v1358 = vmul.f32 %v1322, %v1337
        %v1359 = vmul.f32 %v1323, %v1337
        %v1360 = vmul.f32 %v1324, %v1337
        %v1361 = vmul.f32 %v1325, %v1337
        %v1362 = vmul.f32 %v1326, %v1337
        %v1363 = vmul.f32 %v1327, %v1337
        %v1364 = vmul.f32 %v1328, %v1337
        %v1365 = vmul.f32 %v1329, %v1337
        %v1366 = vmul.f32 %v1330, %v1337
        %v1367 = vmul.f32 %v1331, %v1337
        %v1368 = vmul.f32 %v1332, %v1337
        %v1369 = vmul.f32 %v1333, %v1337
        %v1370 = vld [vmem:[#allocation2 + $0x109] sm:$0xff]
        %v1371 = vld [vmem:[#allocation2 + $0x111] sm:$0xff]
        %v1372 = vlaneseq
        %v1373 = vshrl.u32 %v1372, 7
        %v1374 = vsub.s32 5, %v1373
        %v1375 = vrot.slane %v307, %v1374
        %v1376 = vmul.f32 %v1304, %v1375
        %v1377 = vmul.f32 %v1305, %v1375
        %v1378 = vmul.f32 %v1306, %v1375
        %v1379 = vmul.f32 %v1307, %v1375
        %v1380 = vmul.f32 %v1308, %v1375
        %v1381 = vmul.f32 %v1309, %v1375
        %v1382 = vmul.f32 %v1310, %v1375
        %v1383 = vmul.f32 %v1311, %v1375
        %v1384 = vmul.f32 %v1312, %v1375
        %v1385 = vmul.f32 %v1313, %v1375
        %v1386 = vmul.f32 %v1314, %v1375
        %v1387 = vmul.f32 %v1315, %v1375
        %v1388 = vmul.f32 %v1316, %v1375
        %v1389 = vmul.f32 %v1317, %v1375
        %v1390 = vmul.f32 %v1318, %v1375
        %v1391 = vmul.f32 %v1319, %v1375
        %v1392 = vmul.f32 %v1320, %v1375
        %v1393 = vmul.f32 %v1321, %v1375
        %v1394 = vmul.f32 %v1322, %v1375
        %v1395 = vmul.f32 %v1323, %v1375
        %v1396 = vmul.f32 %v1324, %v1375
        %v1397 = vmul.f32 %v1325, %v1375
        %v1398 = vmul.f32 %v1326, %v1375
        %v1399 = vmul.f32 %v1327, %v1375
        %v1400 = vmul.f32 %v1328, %v1375
        %v1401 = vmul.f32 %v1329, %v1375
        %v1402 = vmul.f32 %v1330, %v1375
        %v1403 = vmul.f32 %v1331, %v1375
        %v1404 = vmul.f32 %v1332, %v1375
        %v1405 = vmul.f32 %v1333, %v1375
        %v1406 = vmul.f32 %v1370, %v1375
        %v1407 = vmul.f32 %v1371, %v1375
        %v1408 = vadd.f32 %v1338, %v1376
        %v1409 = vadd.f32 %v1339, %v1377
        %v1410 = vadd.f32 %v1340, %v1378
        %v1411 = vadd.f32 %v1341, %v1379
        %v1412 = vadd.f32 %v1342, %v1380
        %v1413 = vadd.f32 %v1343, %v1381
        %v1414 = vadd.f32 %v1344, %v1382
        %v1415 = vadd.f32 %v1345, %v1383
        %v1416 = vadd.f32 %v1346, %v1384
        %v1417 = vadd.f32 %v1347, %v1385
        %v1418 = vadd.f32 %v1348, %v1386
        %v1419 = vadd.f32 %v1349, %v1387
        %v1420 = vadd.f32 %v1350, %v1388
        %v1421 = vadd.f32 %v1351, %v1389
        %v1422 = vadd.f32 %v1352, %v1390
        %v1423 = vadd.f32 %v1353, %v1391
        %v1424 = vadd.f32 %v1354, %v1392
        %v1425 = vadd.f32 %v1355, %v1393
        %v1426 = vadd.f32 %v1356, %v1394
        %v1427 = vadd.f32 %v1357, %v1395
        %v1428 = vadd.f32 %v1358, %v1396
        %v1429 = vadd.f32 %v1359, %v1397
        %v1430 = vadd.f32 %v1360, %v1398
        %v1431 = vadd.f32 %v1361, %v1399
        %v1432 = vadd.f32 %v1362, %v1400
        %v1433 = vadd.f32 %v1363, %v1401
        %v1434 = vadd.f32 %v1364, %v1402
        %v1435 = vadd.f32 %v1365, %v1403
        %v1436 = vadd.f32 %v1366, %v1404
        %v1437 = vadd.f32 %v1367, %v1405
        %v1438 = vadd.f32 %v1368, %v1406
        %v1439 = vadd.f32 %v1369, %v1407
        %v1440 = vld [vmem:[#allocation2 + $0x119] sm:$0xff]
        %v1441 = vld [vmem:[#allocation2 + $0x121] sm:$0xff]
        %v1442 = vlaneseq
        %v1443 = vshrl.u32 %v1442, 7
        %v1444 = vsub.s32 0, %v1443
        %v1445 = vrot.slane %v308, %v1444
        %v1446 = vmul.f32 %v1306, %v1445
        %v1447 = vmul.f32 %v1307, %v1445
        %v1448 = vmul.f32 %v1308, %v1445
        %v1449 = vmul.f32 %v1309, %v1445
        %v1450 = vmul.f32 %v1310, %v1445
        %v1451 = vmul.f32 %v1311, %v1445
        %v1452 = vmul.f32 %v1312, %v1445
        %v1453 = vmul.f32 %v1313, %v1445
        %v1454 = vmul.f32 %v1314, %v1445
        %v1455 = vmul.f32 %v1315, %v1445
        %v1456 = vmul.f32 %v1316, %v1445
        %v1457 = vmul.f32 %v1317, %v1445
        %v1458 = vmul.f32 %v1318, %v1445
        %v1459 = vmul.f32 %v1319, %v1445
        %v1460 = vmul.f32 %v1320, %v1445
        %v1461 = vmul.f32 %v1321, %v1445
        %v1462 = vmul.f32 %v1322, %v1445
        %v1463 = vmul.f32 %v1323, %v1445
        %v1464 = vmul.f32 %v1324, %v1445
        %v1465 = vmul.f32 %v1325, %v1445
        %v1466 = vmul.f32 %v1326, %v1445
        %v1467 = vmul.f32 %v1327, %v1445
        %v1468 = vmul.f32 %v1328, %v1445
        %v1469 = vmul.f32 %v1329, %v1445
        %v1470 = vmul.f32 %v1330, %v1445
        %v1471 = vmul.f32 %v1331, %v1445
        %v1472 = vmul.f32 %v1332, %v1445
        %v1473 = vmul.f32 %v1333, %v1445
        %v1474 = vmul.f32 %v1370, %v1445
        %v1475 = vmul.f32 %v1371, %v1445
        %v1476 = vmul.f32 %v1440, %v1445
        %v1477 = vmul.f32 %v1441, %v1445
        %v1478 = vadd.f32 %v1408, %v1446
        %v1479 = vadd.f32 %v1409, %v1447
        %v1480 = vadd.f32 %v1410, %v1448
        %v1481 = vadd.f32 %v1411, %v1449
        %v1482 = vadd.f32 %v1412, %v1450
        %v1483 = vadd.f32 %v1413, %v1451
        %v1484 = vadd.f32 %v1414, %v1452
        %v1485 = vadd.f32 %v1415, %v1453
        %v1486 = vadd.f32 %v1416, %v1454
        %v1487 = vadd.f32 %v1417, %v1455
        %v1488 = vadd.f32 %v1418, %v1456
        %v1489 = vadd.f32 %v1419, %v1457
        %v1490 = vadd.f32 %v1420, %v1458
        %v1491 = vadd.f32 %v1421, %v1459
        %v1492 = vadd.f32 %v1422, %v1460
        %v1493 = vadd.f32 %v1423, %v1461
        %v1494 = vadd.f32 %v1424, %v1462
        %v1495 = vadd.f32 %v1425, %v1463
        %v1496 = vadd.f32 %v1426, %v1464
        %v1497 = vadd.f32 %v1427, %v1465
        %v1498 = vadd.f32 %v1428, %v1466
        %v1499 = vadd.f32 %v1429, %v1467
        %v1500 = vadd.f32 %v1430, %v1468
        %v1501 = vadd.f32 %v1431, %v1469
        %v1502 = vadd.f32 %v1432, %v1470
        %v1503 = vadd.f32 %v1433, %v1471
        %v1504 = vadd.f32 %v1434, %v1472
        %v1505 = vadd.f32 %v1435, %v1473
        %v1506 = vadd.f32 %v1436, %v1474
        %v1507 = vadd.f32 %v1437, %v1475
        %v1508 = vadd.f32 %v1438, %v1476
        %v1509 = vadd.f32 %v1439, %v1477
        %v1510 = vsel %vm758, 1, 0
        %v1511 = vsel %vm759, 1, 0
        %v1512 = vsel %vm760, 1, 0
        %v1513 = vsel %vm761, 1, 0
        %v1514 = vsel %vm762, 1, 0
        %v1515 = vsel %vm763, 1, 0
        %v1516 = vsel %vm764, 1, 0
        %v1517 = vsel %vm765, 1, 0
        %v1518 = vsel %vm766, 1, 0
        %v1519 = vsel %vm767, 1, 0
        %v1520 = vsel %vm768, 1, 0
        %v1521 = vsel %vm769, 1, 0
        %v1522 = vsel %vm770, 1, 0
        %v1523 = vsel %vm771, 1, 0
        %v1524 = vsel %vm772, 1, 0
        %v1525 = vsel %vm773, 1, 0
        %v1526 = vsel %vm774, 1, 0
        %v1527 = vsel %vm775, 1, 0
        %v1528 = vsel %vm776, 1, 0
        %v1529 = vsel %vm777, 1, 0
        %v1530 = vsel %vm778, 1, 0
        %v1531 = vsel %vm779, 1, 0
        %v1532 = vsel %vm780, 1, 0
        %v1533 = vsel %vm781, 1, 0
        %v1534 = vsel %vm782, 1, 0
        %v1535 = vsel %vm783, 1, 0
        %v1536 = vsel %vm784, 1, 0
        %v1537 = vsel %vm785, 1, 0
        %v1538 = vsel %vm786, 1, 0
        %v1539 = vsel %vm787, 1, 0
        %v1540 = vsel %vm788, 1, 0
        %v1541 = vsel %vm789, 1, 0
        %vm1542 = vcmp.eq.s32.totalorder %v1510, 1
        %vm1543 = vcmp.eq.s32.totalorder %v1511, 1
        %vm1544 = vcmp.eq.s32.totalorder %v1512, 1
        %vm1545 = vcmp.eq.s32.totalorder %v1513, 1
        %vm1546 = vcmp.eq.s32.totalorder %v1514, 1
        %vm1547 = vcmp.eq.s32.totalorder %v1515, 1
        %vm1548 = vcmp.eq.s32.totalorder %v1516, 1
        %vm1549 = vcmp.eq.s32.totalorder %v1517, 1
        %vm1550 = vcmp.eq.s32.totalorder %v1518, 1
        %vm1551 = vcmp.eq.s32.totalorder %v1519, 1
        %vm1552 = vcmp.eq.s32.totalorder %v1520, 1
        %vm1553 = vcmp.eq.s32.totalorder %v1521, 1
        %vm1554 = vcmp.eq.s32.totalorder %v1522, 1
        %vm1555 = vcmp.eq.s32.totalorder %v1523, 1
        %vm1556 = vcmp.eq.s32.totalorder %v1524, 1
        %vm1557 = vcmp.eq.s32.totalorder %v1525, 1
        %vm1558 = vcmp.eq.s32.totalorder %v1526, 1
        %vm1559 = vcmp.eq.s32.totalorder %v1527, 1
        %vm1560 = vcmp.eq.s32.totalorder %v1528, 1
        %vm1561 = vcmp.eq.s32.totalorder %v1529, 1
        %vm1562 = vcmp.eq.s32.totalorder %v1530, 1
        %vm1563 = vcmp.eq.s32.totalorder %v1531, 1
        %vm1564 = vcmp.eq.s32.totalorder %v1532, 1
        %vm1565 = vcmp.eq.s32.totalorder %v1533, 1
        %vm1566 = vcmp.eq.s32.totalorder %v1534, 1
        %vm1567 = vcmp.eq.s32.totalorder %v1535, 1
        %vm1568 = vcmp.eq.s32.totalorder %v1536, 1
        %vm1569 = vcmp.eq.s32.totalorder %v1537, 1
        %vm1570 = vcmp.eq.s32.totalorder %v1538, 1
        %vm1571 = vcmp.eq.s32.totalorder %v1539, 1
        %vm1572 = vcmp.eq.s32.totalorder %v1540, 1
        %vm1573 = vcmp.eq.s32.totalorder %v1541, 1
        %v1574 = vsel %vm1542, %v1478, 0.0
        %v1575 = vsel %vm1543, %v1479, 0.0
        %v1576 = vsel %vm1544, %v1480, 0.0
        %v1577 = vsel %vm1545, %v1481, 0.0
        %v1578 = vsel %vm1546, %v1482, 0.0
        %v1579 = vsel %vm1547, %v1483, 0.0
        %v1580 = vsel %vm1548, %v1484, 0.0
        %v1581 = vsel %vm1549, %v1485, 0.0
        %v1582 = vsel %vm1550, %v1486, 0.0
        %v1583 = vsel %vm1551, %v1487, 0.0
        %v1584 = vsel %vm1552, %v1488, 0.0
        %v1585 = vsel %vm1553, %v1489, 0.0
        %v1586 = vsel %vm1554, %v1490, 0.0
        %v1587 = vsel %vm1555, %v1491, 0.0
        %v1588 = vsel %vm1556, %v1492, 0.0
        %v1589 = vsel %vm1557, %v1493, 0.0
        %v1590 = vsel %vm1558, %v1494, 0.0
        %v1591 = vsel %vm1559, %v1495, 0.0
        %v1592 = vsel %vm1560, %v1496, 0.0
        %v1593 = vsel %vm1561, %v1497, 0.0
        %v1594 = vsel %vm1562, %v1498, 0.0
        %v1595 = vsel %vm1563, %v1499, 0.0
        %v1596 = vsel %vm1564, %v1500, 0.0
        %v1597 = vsel %vm1565, %v1501, 0.0
        %v1598 = vsel %vm1566, %v1502, 0.0
        %v1599 = vsel %vm1567, %v1503, 0.0
        %v1600 = vsel %vm1568, %v1504, 0.0
        %v1601 = vsel %vm1569, %v1505, 0.0
        %v1602 = vsel %vm1570, %v1506, 0.0
        %v1603 = vsel %vm1571, %v1507, 0.0
        %v1604 = vsel %vm1572, %v1508, 0.0
        %v1605 = vsel %vm1573, %v1509, 0.0
        %v1606 = vadd.f32 %v966, %v1270
        %v1607 = vadd.f32 %v967, %v1271
        %v1608 = vadd.f32 %v968, %v1272
        %v1609 = vadd.f32 %v969, %v1273
        %v1610 = vadd.f32 %v970, %v1274
        %v1611 = vadd.f32 %v971, %v1275
        %v1612 = vadd.f32 %v972, %v1276
        %v1613 = vadd.f32 %v973, %v1277
        %v1614 = vadd.f32 %v974, %v1278
        %v1615 = vadd.f32 %v975, %v1279
        %v1616 = vadd.f32 %v976, %v1280
        %v1617 = vadd.f32 %v977, %v1281
        %v1618 = vadd.f32 %v978, %v1282
        %v1619 = vadd.f32 %v979, %v1283
        %v1620 = vadd.f32 %v980, %v1284
        %v1621 = vadd.f32 %v981, %v1285
        %v1622 = vadd.f32 %v982, %v1286
        %v1623 = vadd.f32 %v983, %v1287
        %v1624 = vadd.f32 %v984, %v1288
        %v1625 = vadd.f32 %v985, %v1289
        %v1626 = vadd.f32 %v986, %v1290
        %v1627 = vadd.f32 %v987, %v1291
        %v1628 = vadd.f32 %v988, %v1292
        %v1629 = vadd.f32 %v989, %v1293
        %v1630 = vadd.f32 %v990, %v1294
        %v1631 = vadd.f32 %v991, %v1295
        %v1632 = vadd.f32 %v992, %v1296
        %v1633 = vadd.f32 %v993, %v1297
        %v1634 = vadd.f32 %v994, %v1298
        %v1635 = vadd.f32 %v995, %v1299
        %v1636 = vadd.f32 %v996, %v1300
        %v1637 = vadd.f32 %v997, %v1301
        %v1638 = vadd.f32 %v1606, %v1574
        %v1639 = vadd.f32 %v1607, %v1575
        %v1640 = vadd.f32 %v1608, %v1576
        %v1641 = vadd.f32 %v1609, %v1577
        %v1642 = vadd.f32 %v1610, %v1578
        %v1643 = vadd.f32 %v1611, %v1579
        %v1644 = vadd.f32 %v1612, %v1580
        %v1645 = vadd.f32 %v1613, %v1581
        %v1646 = vadd.f32 %v1614, %v1582
        %v1647 = vadd.f32 %v1615, %v1583
        %v1648 = vadd.f32 %v1616, %v1584
        %v1649 = vadd.f32 %v1617, %v1585
        %v1650 = vadd.f32 %v1618, %v1586
        %v1651 = vadd.f32 %v1619, %v1587
        %v1652 = vadd.f32 %v1620, %v1588
        %v1653 = vadd.f32 %v1621, %v1589
        %v1654 = vadd.f32 %v1622, %v1590
        %v1655 = vadd.f32 %v1623, %v1591
        %v1656 = vadd.f32 %v1624, %v1592
        %v1657 = vadd.f32 %v1625, %v1593
        %v1658 = vadd.f32 %v1626, %v1594
        %v1659 = vadd.f32 %v1627, %v1595
        %v1660 = vadd.f32 %v1628, %v1596
        %v1661 = vadd.f32 %v1629, %v1597
        %v1662 = vadd.f32 %v1630, %v1598
        %v1663 = vadd.f32 %v1631, %v1599
        %v1664 = vadd.f32 %v1632, %v1600
        %v1665 = vadd.f32 %v1633, %v1601
        %v1666 = vadd.f32 %v1634, %v1602
        %v1667 = vadd.f32 %v1635, %v1603
        %v1668 = vadd.f32 %v1636, %v1604
        %v1669 = vadd.f32 %v1637, %v1605
        %v1670 = vld [vmem:[%s236] sm:$0x1]
        %v1672 = vlaneseq
        %v1673 = vshrl.u32 %v1672, 7
        %v1674 = vsub.s32 0, %v1673
        %v1675 = vrot.slane %v1670, %v1674
        %v1677 = vadd.f32 %v1638, %v1675
        %v1678 = vadd.f32 %v1639, %v1675
        %v1679 = vadd.f32 %v1640, %v1675
        %v1680 = vadd.f32 %v1641, %v1675
        %v1681 = vadd.f32 %v1642, %v1675
        %v1682 = vadd.f32 %v1643, %v1675
        %v1683 = vadd.f32 %v1644, %v1675
        %v1684 = vadd.f32 %v1645, %v1675
        %v1685 = vadd.f32 %v1646, %v1675
        %v1686 = vadd.f32 %v1647, %v1675
        %v1687 = vadd.f32 %v1648, %v1675
        %v1688 = vadd.f32 %v1649, %v1675
        %v1689 = vadd.f32 %v1650, %v1675
        %v1690 = vadd.f32 %v1651, %v1675
        %v1691 = vadd.f32 %v1652, %v1675
        %v1692 = vadd.f32 %v1653, %v1675
        %v1693 = vadd.f32 %v1654, %v1675
        %v1694 = vadd.f32 %v1655, %v1675
        %v1695 = vadd.f32 %v1656, %v1675
        %v1696 = vadd.f32 %v1657, %v1675
        %v1697 = vadd.f32 %v1658, %v1675
        %v1698 = vadd.f32 %v1659, %v1675
        %v1699 = vadd.f32 %v1660, %v1675
        %v1700 = vadd.f32 %v1661, %v1675
        %v1701 = vadd.f32 %v1662, %v1675
        %v1702 = vadd.f32 %v1663, %v1675
        %v1703 = vadd.f32 %v1664, %v1675
        %v1704 = vadd.f32 %v1665, %v1675
        %v1705 = vadd.f32 %v1666, %v1675
        %v1706 = vadd.f32 %v1667, %v1675
        %v1707 = vadd.f32 %v1668, %v1675
        %v1708 = vadd.f32 %v1669, %v1675
        %1709 = vst [vmem:[%s229] sm:$0xff] %v1677
        %1710 = vst [vmem:[%s229 + $0x8] sm:$0xff] %v1678
        %1711 = vst [vmem:[%s229 + $0x10] sm:$0xff] %v1679
        %1712 = vst [vmem:[%s229 + $0x18] sm:$0xff] %v1680
        %1713 = vst [vmem:[%s229 + $0x20] sm:$0xff] %v1681
        %1714 = vst [vmem:[%s229 + $0x28] sm:$0xff] %v1682
        %1715 = vst [vmem:[%s229 + $0x30] sm:$0xff] %v1683
        %1716 = vst [vmem:[%s229 + $0x38] sm:$0xff] %v1684
        %1717 = vst [vmem:[%s229 + $0x40] sm:$0xff] %v1685
        %1718 = vst [vmem:[%s229 + $0x48] sm:$0xff] %v1686
        %1719 = vst [vmem:[%s229 + $0x50] sm:$0xff] %v1687
        %1720 = vst [vmem:[%s229 + $0x58] sm:$0xff] %v1688
        %1721 = vst [vmem:[%s229 + $0x60] sm:$0xff] %v1689
        %1722 = vst [vmem:[%s229 + $0x68] sm:$0xff] %v1690
        %1723 = vst [vmem:[%s229 + $0x70] sm:$0xff] %v1691
        %1724 = vst [vmem:[%s229 + $0x78] sm:$0xff] %v1692
        %1725 = vst [vmem:[%s229 + $0x80] sm:$0xff] %v1693
        %1726 = vst [vmem:[%s229 + $0x88] sm:$0xff] %v1694
        %1727 = vst [vmem:[%s229 + $0x90] sm:$0xff] %v1695
        %1728 = vst [vmem:[%s229 + $0x98] sm:$0xff] %v1696
        %1729 = vst [vmem:[%s229 + $0xa0] sm:$0xff] %v1697
        %1730 = vst [vmem:[%s229 + $0xa8] sm:$0xff] %v1698
        %1731 = vst [vmem:[%s229 + $0xb0] sm:$0xff] %v1699
        %1732 = vst [vmem:[%s229 + $0xb8] sm:$0xff] %v1700
        %1733 = vst [vmem:[%s229 + $0xc0] sm:$0xff] %v1701
        %1734 = vst [vmem:[%s229 + $0xc8] sm:$0xff] %v1702
        %1735 = vst [vmem:[%s229 + $0xd0] sm:$0xff] %v1703
        %1736 = vst [vmem:[%s229 + $0xd8] sm:$0xff] %v1704
        %1737 = vst [vmem:[%s229 + $0xe0] sm:$0xff] %v1705
        %1738 = vst [vmem:[%s229 + $0xe8] sm:$0xff] %v1706
        %1739 = vst [vmem:[%s229 + $0xf0] sm:$0xff] %v1707
        %1740 = vst [vmem:[%s229 + $0xf8] sm:$0xff] %v1708
        %s1741 = sand.u32 %s122, 1
        %s1742 = scalar_lea.sflag [#allocation5], %s1741
        %s1743 = sand.u32 %s122, 1
        %s1744 = smul.addr %s1743, 256
        %s1745 = scalar_lea.vmem [#allocation6], %s1744
        // Predicated region
        $region37: #{dwconv_forward.1} parent=31 // pred_check
          %p1746 = pneg %p132
        $region38: #{dwconv_forward.1} parent=31 // pred_check_branch
          %1748 = sbr.rel (%p1746) target = $region40
        $region39: #{dwconv_forward.1} parent=31 // pred_region
          %s1750 = ssub.s32 4096, 4096
          %1751 = vsyncadd %s1742, %s1750
          %s1752 = smul.addr %s24, 32
          %s1753 = sadd.s32 %s25, %s1752
          %s1754 = smul.addr %s1753, 128
          %s1755 = scalar_lea.hbm %s3, %s1754
          %s1756 = sshll.u32 %s1745, 4
          %s1757 = int_to_ptr.vmem [resolvable:$true] %s1756
          %1762 = dma.vmem_to_hbm [thread:$0]  %s1757, 4096, %s1755, %s1742, 128, 128, 8
        $region40: #{dwconv_forward.1} parent=31 // pred_fallthru
          _
      $region32: #{dwconv_forward.1} parent=5 // pred_fallthru
        _
      %p1763 = scmp.le.s32.totalorder 2, %s15
      // Predicated region
      $region41: #{dwconv_forward.1} parent=5 // pred_check
        %p1764 = pneg %p1763
      $region42: #{dwconv_forward.1} parent=5 // pred_check_branch
        %1766 = sbr.rel (%p1764) target = $region44
      $region43: #{dwconv_forward.1} parent=5 // pred_region
        %s1767 = ssub.s32 %s15, 2
        // Predicated region
        $region45: #{dwconv_forward.1} parent=43 // pred_check
          %p1768 = pneg %p138
        $region46: #{dwconv_forward.1} parent=43 // pred_check_branch
          %1770 = sbr.rel (%p1768) target = $region48
        $region47: #{dwconv_forward.1} parent=43 // pred_region
          %s1771 = sand.u32 %s123, 1
          %s1772 = scalar_lea.sflag [#allocation5], %s1771
          %s1773 = sand.u32 %s123, 1
          %s1774 = smul.addr %s1773, 256
          %s1775 = scalar_lea.vmem [#allocation6], %s1774
          %1776 = dma.done %s1772, 4096
        $region48: #{dwconv_forward.1} parent=43 // pred_fallthru
          _
      $region44: #{dwconv_forward.1} parent=5 // pred_fallthru
        _
    $region6: #{dwconv_forward.1} parent=1 // loop_footer
      %s19 = sadd.s32 1, %s15
    $region7: #{dwconv_forward.1} parent=1 // loop_footer_branch
      %14 = sbr.rel target = $region3
    $region8: #{dwconv_forward.1} parent=1 // loop_exit
      _
    %1777 = vsyncpa [#allocation4], 1
    %s1778 = scalar_lea.sflag [#allocation4], 1
    %1779 = vsyncpa %s1778, 1
    %1780 = vsyncpa [#allocation5], 1
    %s1781 = scalar_lea.sflag [#allocation5], 1
    %1782 = vsyncpa %s1781, 1

</llo_original>
